<compile_context>
chip_gen: v5e
topology: v5e:2x2
jax: 0.10.0
libtpu: 0.0.40
codegen_flags: <defaults>
</compile_context>

<pallas_src>
import functools

import jax
import jax.numpy as jnp
from jax.experimental import pallas as pl
from jax.experimental.pallas import tpu as pltpu


def _resblock_kernel(x_ref, w1_ref, b1_ref, w2_ref, b2_ref, o_ref, *, H, W):
    """x_ref: (1, C, H*W + 4*PAD) zero-haloed flattened input,
       w*_ref: (9, C, C) per-tap weight slices, b*_ref: (C, 1),
       o_ref: (1, C, H*W)."""
    HW = H * W
    PAD = W + 1                                   # max |flat tap shift|

    xv = x_ref[0].astype(jnp.float32)             # [C, HW + 4*PAD]
    C = xv.shape[0]

    def conv3x3(src, w_ref, wcol, out_len):
        # src: [C, out_len + 2*PAD]; output position i reads src[:, PAD+i+s]
        # for tap shift s = dh*W + dw.  Column masks give zero-pad semantics
        # for the dw = +/-1 taps (row wrap); the zero halo covers dh = +/-1.
        left_ok = wcol >= 1                       # tap with dw = -1 is valid
        right_ok = wcol <= W - 2                  # tap with dw = +1 is valid
        acc = jnp.zeros((C, out_len), jnp.float32)
        for t in range(9):                        # static unroll: 9 taps
            dh, dw = t // 3 - 1, t % 3 - 1
            s = dh * W + dw
            tap = src[:, PAD + s: PAD + s + out_len]
            if dw == -1:
                tap = jnp.where(left_ok, tap, 0.0)
            elif dw == 1:
                tap = jnp.where(right_ok, tap, 0.0)
            acc = acc + jnp.dot(w_ref[t], tap,
                                preferred_element_type=jnp.float32)
        return acc

    # ---- conv1 + bias + ReLU, computed on an extended range so conv2 can
    #      read its own +/-PAD halo straight out of the result -------------
    ext = HW + 2 * PAD
    i1 = jax.lax.broadcasted_iota(jnp.int32, (1, ext), 1)
    wcol1 = (i1 + ((-PAD) % W)) % W               # column coord of ext pos
    h1 = conv3x3(xv, w1_ref, wcol1, ext) + b1_ref[...]
    h1 = jnp.maximum(h1, 0.0)                     # activation='relu'
    core = (i1 >= PAD) & (i1 < PAD + HW)          # real [0, HW) positions
    h1 = jnp.where(core, h1, 0.0)                 # zero halo for conv2's pad

    # ---- conv2 + bias (activation='none') + residual ---------------------
    i2 = jax.lax.broadcasted_iota(jnp.int32, (1, HW), 1)
    wcol2 = i2 % W
    h2 = conv3x3(h1, w2_ref, wcol2, HW) + b2_ref[...]

    x_res = xv[:, 2 * PAD: 2 * PAD + HW]          # original x, compact layout
    o_ref[0] = (h2 + x_res).astype(o_ref.dtype)


def resblock_forward(x, w1, b1, w2, b2):
    """x: [N, C, H, W]; w1,w2: [C, C, 3, 3]; b1,b2: [C]."""
    N, C, H, W = x.shape
    HW = H * W
    PAD = W + 1

    # NCHW -> [N, C, H*W] (free reshape, no transpose) + small zero halo so
    # every conv tap is a static lane-offset slice inside the kernel.
    x_flat = x.reshape(N, C, HW)
    x_halo = jnp.pad(x_flat, ((0, 0), (0, 0), (2 * PAD, 2 * PAD)))
    Lx = HW + 4 * PAD

    # [Cout, Cin, 3, 3] -> [9, Cout, Cin] (tap-major weight slices), bias [C,1]
    w1t = jnp.transpose(w1, (2, 3, 0, 1)).reshape(9, C, C)
    w2t = jnp.transpose(w2, (2, 3, 0, 1)).reshape(9, C, C)
    b1c = b1.reshape(C, 1)
    b2c = b2.reshape(C, 1)

    kernel = functools.partial(_resblock_kernel, H=H, W=W)
    out = pl.pallas_call(
        kernel,
        out_shape=jax.ShapeDtypeStruct((N, C, HW), x.dtype),
        grid_spec=pltpu.PrefetchScalarGridSpec(
            num_scalar_prefetch=0,
            grid=(N,),
            in_specs=[
                pl.BlockSpec((1, C, Lx), lambda n: (n, 0, 0)),   # haloed x
                pl.BlockSpec((9, C, C), lambda n: (0, 0, 0)),    # conv1 weight
                pl.BlockSpec((C, 1), lambda n: (0, 0)),          # conv1 bias
                pl.BlockSpec((9, C, C), lambda n: (0, 0, 0)),    # conv2 weight
                pl.BlockSpec((C, 1), lambda n: (0, 0)),          # conv2 bias
            ],
            out_specs=pl.BlockSpec((1, C, HW), lambda n: (n, 0, 0)),
        ),
        compiler_params=pltpu.CompilerParams(
            dimension_semantics=("parallel",)),
    )(x_halo, w1t, b1c, w2t, b2c)

    return out.reshape(N, C, H, W)


if __name__ == "__main__":
    # ResBlock(dim=4, norm='none', activation='relu', pad_type='zero')
    N, C, H, W = 2, 4, 16, 16
    KH = KW = 3

    key = jax.random.PRNGKey(0)
    kx, kw1, kb1, kw2, kb2 = jax.random.split(key, 5)

    x = jax.random.normal(kx, (N, C, H, W), dtype=jnp.float32)
    fan_in = C * KH * KW
    bound = 1.0 / (fan_in ** 0.5)
    w1 = jax.random.uniform(kw1, (C, C, KH, KW), jnp.float32, -bound, bound)
    b1 = jax.random.uniform(kb1, (C,), jnp.float32, -bound, bound)
    w2 = jax.random.uniform(kw2, (C, C, KH, KW), jnp.float32, -bound, bound)
    b2 = jax.random.uniform(kb2, (C,), jnp.float32, -bound, bound)

    out = jax.block_until_ready(resblock_forward(x, w1, b1, w2, b2))

    # Reference: XLA convs with identical semantics (conv+bias+relu, conv+bias,
    # residual add).
    def conv_ref(v, w, b):
        y = jax.lax.conv_general_dilated(
            v, w, window_strides=(1, 1), padding=((1, 1), (1, 1)),
            dimension_numbers=("NCHW", "OIHW", "NCHW"))
        return y + b.reshape(1, -1, 1, 1)

    ref = conv_ref(jnp.maximum(conv_ref(x, w1, b1), 0.0), w2, b2) + x

    assert out.shape == (N, C, H, W)
    assert jnp.allclose(out, ref, atol=1e-3, rtol=1e-3), \
        float(jnp.max(jnp.abs(out - ref)))

    print("KERNEL_OK")
</pallas_src>

<mosaic_0001>
module attributes {stable_mosaic.version = 11 : i64} {
  func.func @_resblock_kernel(%arg0: i32, %arg1: memref<1x4x324xf32, #tpu.memory_space<vmem>>, %arg2: memref<9x4x4xf32, #tpu.memory_space<vmem>>, %arg3: memref<4x1xf32, #tpu.memory_space<vmem>>, %arg4: memref<9x4x4xf32, #tpu.memory_space<vmem>>, %arg5: memref<4x1xf32, #tpu.memory_space<vmem>>, %arg6: memref<1x4x256xf32, #tpu.memory_space<vmem>>) attributes {dimension_semantics = [#tpu.dimension_semantics<parallel>], iteration_bounds = array<i64: 2>, scalar_prefetch = 0 : i64, scratch_operands = 0 : i64, tpu.core_type = #tpu.core_type<tc>, window_params = [{transform_indices = @transform_0, window_bounds = array<i64: 1, 4, 324>}, {pipeline_mode = #tpu.pipeline_mode<synchronous>, transform_indices = @transform_1, window_bounds = array<i64: 9, 4, 4>}, {pipeline_mode = #tpu.pipeline_mode<synchronous>, transform_indices = @transform_2, window_bounds = array<i64: 4, 1>}, {pipeline_mode = #tpu.pipeline_mode<synchronous>, transform_indices = @transform_3, window_bounds = array<i64: 9, 4, 4>}, {pipeline_mode = #tpu.pipeline_mode<synchronous>, transform_indices = @transform_4, window_bounds = array<i64: 4, 1>}, {transform_indices = @transform_5, window_bounds = array<i64: 1, 4, 256>}]} {
    %c0 = arith.constant 0 : index
    %c0_0 = arith.constant 0 : index
    %c0_1 = arith.constant 0 : index
    %0 = vector.load %arg1[%c0, %c0_0, %c0_1] : memref<1x4x324xf32, #tpu.memory_space<vmem>>, vector<1x4x324xf32>
    %1 = vector.shape_cast %0 : vector<1x4x324xf32> to vector<4x324xf32>
    %2 = tpu.iota {dimensions = array<i32: 1>} : vector<1x290xi32>
    %c15_i32 = arith.constant 15 : i32
    %3 = vector.broadcast %c15_i32 : i32 to vector<1x290xi32>
    %4 = arith.addi %2, %3 : vector<1x290xi32>
    %c16_i32 = arith.constant 16 : i32
    %c0_i32 = arith.constant 0 : i32
    %5 = arith.cmpi eq, %c16_i32, %c0_i32 : i32
    %c1_i32 = arith.constant 1 : i32
    %6 = arith.select %5, %c1_i32, %c16_i32 : i32
    %7 = vector.broadcast %6 : i32 to vector<1x290xi32>
    %8 = arith.remsi %4, %7 : vector<1x290xi32>
    %c0_i32_2 = arith.constant 0 : i32
    %9 = vector.broadcast %c0_i32_2 : i32 to vector<1x290xi32>
    %10 = arith.cmpi ne, %8, %9 : vector<1x290xi32>
    %c0_i32_3 = arith.constant 0 : i32
    %11 = vector.broadcast %c0_i32_3 : i32 to vector<1x290xi32>
    %12 = arith.cmpi slt, %8, %11 : vector<1x290xi32>
    %c0_i32_4 = arith.constant 0 : i32
    %13 = arith.cmpi slt, %6, %c0_i32_4 : i32
    %14 = vector.broadcast %13 : i1 to vector<1x290xi1>
    %15 = vector.broadcast %14 : vector<1x290xi1> to vector<1x290xi1>
    %16 = arith.xori %12, %15 : vector<1x290xi1>
    %17 = arith.andi %16, %10 : vector<1x290xi1>
    %18 = vector.broadcast %6 : i32 to vector<1x290xi32>
    %19 = arith.addi %8, %18 : vector<1x290xi32>
    %20 = arith.select %17, %19, %8 : vector<1x290xi1>, vector<1x290xi32>
    %c1_i32_5 = arith.constant 1 : i32
    %21 = vector.broadcast %c1_i32_5 : i32 to vector<1x290xi32>
    %22 = arith.cmpi sge, %20, %21 : vector<1x290xi32>
    %c14_i32 = arith.constant 14 : i32
    %23 = vector.broadcast %c14_i32 : i32 to vector<1x290xi32>
    %24 = arith.cmpi sle, %20, %23 : vector<1x290xi32>
    %cst = arith.constant 0.000000e+00 : f32
    %25 = vector.broadcast %cst : f32 to vector<4x290xf32>
    %26 = vector.extract_strided_slice %1 {offsets = [0, 0], sizes = [4, 290], strides = [1, 1]} : vector<4x324xf32> to vector<4x290xf32>
    %cst_6 = arith.constant 0.000000e+00 : f32
    %27 = vector.shape_cast %22 : vector<1x290xi1> to vector<1x290xi1>
    %28 = vector.broadcast %27 : vector<1x290xi1> to vector<4x290xi1>
    %29 = vector.broadcast %cst_6 : f32 to vector<4x290xf32>
    %30 = arith.select %28, %26, %29 : vector<4x290xi1>, vector<4x290xf32>
    %c0_7 = arith.constant 0 : index
    %c0_8 = arith.constant 0 : index
    %c0_9 = arith.constant 0 : index
    %31 = vector.load %arg2[%c0_7, %c0_8, %c0_9] : memref<9x4x4xf32, #tpu.memory_space<vmem>>, vector<1x4x4xf32>
    %32 = vector.shape_cast %31 : vector<1x4x4xf32> to vector<4x4xf32>
    %cst_10 = arith.constant dense<0.000000e+00> : vector<4x290xf32>
    %33 = tpu.matmul %32, %30, %cst_10 {dimension_numbers = #tpu.dot_dimension_numbers<[1], [0], [0], [1], [0, 0, 1, 1], [], []>} : vector<4x4xf32>, vector<4x290xf32>, vector<4x290xf32> -> vector<4x290xf32>
    %34 = arith.addf %25, %33 : vector<4x290xf32>
    %35 = vector.extract_strided_slice %1 {offsets = [0, 1], sizes = [4, 290], strides = [1, 1]} : vector<4x324xf32> to vector<4x290xf32>
    %c1 = arith.constant 1 : index
    %c0_11 = arith.constant 0 : index
    %c0_12 = arith.constant 0 : index
    %36 = vector.load %arg2[%c1, %c0_11, %c0_12] : memref<9x4x4xf32, #tpu.memory_space<vmem>>, vector<1x4x4xf32>
    %37 = vector.shape_cast %36 : vector<1x4x4xf32> to vector<4x4xf32>
    %cst_13 = arith.constant dense<0.000000e+00> : vector<4x290xf32>
    %38 = tpu.matmul %37, %35, %cst_13 {dimension_numbers = #tpu.dot_dimension_numbers<[1], [0], [0], [1], [0, 0, 1, 1], [], []>} : vector<4x4xf32>, vector<4x290xf32>, vector<4x290xf32> -> vector<4x290xf32>
    %39 = arith.addf %34, %38 : vector<4x290xf32>
    %40 = vector.extract_strided_slice %1 {offsets = [0, 2], sizes = [4, 290], strides = [1, 1]} : vector<4x324xf32> to vector<4x290xf32>
    %cst_14 = arith.constant 0.000000e+00 : f32
    %41 = vector.shape_cast %24 : vector<1x290xi1> to vector<1x290xi1>
    %42 = vector.broadcast %41 : vector<1x290xi1> to vector<4x290xi1>
    %43 = vector.broadcast %cst_14 : f32 to vector<4x290xf32>
    %44 = arith.select %42, %40, %43 : vector<4x290xi1>, vector<4x290xf32>
    %c2 = arith.constant 2 : index
    %c0_15 = arith.constant 0 : index
    %c0_16 = arith.constant 0 : index
    %45 = vector.load %arg2[%c2, %c0_15, %c0_16] : memref<9x4x4xf32, #tpu.memory_space<vmem>>, vector<1x4x4xf32>
    %46 = vector.shape_cast %45 : vector<1x4x4xf32> to vector<4x4xf32>
    %cst_17 = arith.constant dense<0.000000e+00> : vector<4x290xf32>
    %47 = tpu.matmul %46, %44, %cst_17 {dimension_numbers = #tpu.dot_dimension_numbers<[1], [0], [0], [1], [0, 0, 1, 1], [], []>} : vector<4x4xf32>, vector<4x290xf32>, vector<4x290xf32> -> vector<4x290xf32>
    %48 = arith.addf %39, %47 : vector<4x290xf32>
    %49 = vector.extract_strided_slice %1 {offsets = [0, 16], sizes = [4, 290], strides = [1, 1]} : vector<4x324xf32> to vector<4x290xf32>
    %cst_18 = arith.constant 0.000000e+00 : f32
    %50 = vector.shape_cast %22 : vector<1x290xi1> to vector<1x290xi1>
    %51 = vector.broadcast %50 : vector<1x290xi1> to vector<4x290xi1>
    %52 = vector.broadcast %cst_18 : f32 to vector<4x290xf32>
    %53 = arith.select %51, %49, %52 : vector<4x290xi1>, vector<4x290xf32>
    %c3 = arith.constant 3 : index
    %c0_19 = arith.constant 0 : index
    %c0_20 = arith.constant 0 : index
    %54 = vector.load %arg2[%c3, %c0_19, %c0_20] : memref<9x4x4xf32, #tpu.memory_space<vmem>>, vector<1x4x4xf32>
    %55 = vector.shape_cast %54 : vector<1x4x4xf32> to vector<4x4xf32>
    %cst_21 = arith.constant dense<0.000000e+00> : vector<4x290xf32>
    %56 = tpu.matmul %55, %53, %cst_21 {dimension_numbers = #tpu.dot_dimension_numbers<[1], [0], [0], [1], [0, 0, 1, 1], [], []>} : vector<4x4xf32>, vector<4x290xf32>, vector<4x290xf32> -> vector<4x290xf32>
    %57 = arith.addf %48, %56 : vector<4x290xf32>
    %58 = vector.extract_strided_slice %1 {offsets = [0, 17], sizes = [4, 290], strides = [1, 1]} : vector<4x324xf32> to vector<4x290xf32>
    %c4 = arith.constant 4 : index
    %c0_22 = arith.constant 0 : index
    %c0_23 = arith.constant 0 : index
    %59 = vector.load %arg2[%c4, %c0_22, %c0_23] : memref<9x4x4xf32, #tpu.memory_space<vmem>>, vector<1x4x4xf32>
    %60 = vector.shape_cast %59 : vector<1x4x4xf32> to vector<4x4xf32>
    %cst_24 = arith.constant dense<0.000000e+00> : vector<4x290xf32>
    %61 = tpu.matmul %60, %58, %cst_24 {dimension_numbers = #tpu.dot_dimension_numbers<[1], [0], [0], [1], [0, 0, 1, 1], [], []>} : vector<4x4xf32>, vector<4x290xf32>, vector<4x290xf32> -> vector<4x290xf32>
    %62 = arith.addf %57, %61 : vector<4x290xf32>
    %63 = vector.extract_strided_slice %1 {offsets = [0, 18], sizes = [4, 290], strides = [1, 1]} : vector<4x324xf32> to vector<4x290xf32>
    %cst_25 = arith.constant 0.000000e+00 : f32
    %64 = vector.shape_cast %24 : vector<1x290xi1> to vector<1x290xi1>
    %65 = vector.broadcast %64 : vector<1x290xi1> to vector<4x290xi1>
    %66 = vector.broadcast %cst_25 : f32 to vector<4x290xf32>
    %67 = arith.select %65, %63, %66 : vector<4x290xi1>, vector<4x290xf32>
    %c5 = arith.constant 5 : index
    %c0_26 = arith.constant 0 : index
    %c0_27 = arith.constant 0 : index
    %68 = vector.load %arg2[%c5, %c0_26, %c0_27] : memref<9x4x4xf32, #tpu.memory_space<vmem>>, vector<1x4x4xf32>
    %69 = vector.shape_cast %68 : vector<1x4x4xf32> to vector<4x4xf32>
    %cst_28 = arith.constant dense<0.000000e+00> : vector<4x290xf32>
    %70 = tpu.matmul %69, %67, %cst_28 {dimension_numbers = #tpu.dot_dimension_numbers<[1], [0], [0], [1], [0, 0, 1, 1], [], []>} : vector<4x4xf32>, vector<4x290xf32>, vector<4x290xf32> -> vector<4x290xf32>
    %71 = arith.addf %62, %70 : vector<4x290xf32>
    %72 = vector.extract_strided_slice %1 {offsets = [0, 32], sizes = [4, 290], strides = [1, 1]} : vector<4x324xf32> to vector<4x290xf32>
    %cst_29 = arith.constant 0.000000e+00 : f32
    %73 = vector.shape_cast %22 : vector<1x290xi1> to vector<1x290xi1>
    %74 = vector.broadcast %73 : vector<1x290xi1> to vector<4x290xi1>
    %75 = vector.broadcast %cst_29 : f32 to vector<4x290xf32>
    %76 = arith.select %74, %72, %75 : vector<4x290xi1>, vector<4x290xf32>
    %c6 = arith.constant 6 : index
    %c0_30 = arith.constant 0 : index
    %c0_31 = arith.constant 0 : index
    %77 = vector.load %arg2[%c6, %c0_30, %c0_31] : memref<9x4x4xf32, #tpu.memory_space<vmem>>, vector<1x4x4xf32>
    %78 = vector.shape_cast %77 : vector<1x4x4xf32> to vector<4x4xf32>
    %cst_32 = arith.constant dense<0.000000e+00> : vector<4x290xf32>
    %79 = tpu.matmul %78, %76, %cst_32 {dimension_numbers = #tpu.dot_dimension_numbers<[1], [0], [0], [1], [0, 0, 1, 1], [], []>} : vector<4x4xf32>, vector<4x290xf32>, vector<4x290xf32> -> vector<4x290xf32>
    %80 = arith.addf %71, %79 : vector<4x290xf32>
    %81 = vector.extract_strided_slice %1 {offsets = [0, 33], sizes = [4, 290], strides = [1, 1]} : vector<4x324xf32> to vector<4x290xf32>
    %c7 = arith.constant 7 : index
    %c0_33 = arith.constant 0 : index
    %c0_34 = arith.constant 0 : index
    %82 = vector.load %arg2[%c7, %c0_33, %c0_34] : memref<9x4x4xf32, #tpu.memory_space<vmem>>, vector<1x4x4xf32>
    %83 = vector.shape_cast %82 : vector<1x4x4xf32> to vector<4x4xf32>
    %cst_35 = arith.constant dense<0.000000e+00> : vector<4x290xf32>
    %84 = tpu.matmul %83, %81, %cst_35 {dimension_numbers = #tpu.dot_dimension_numbers<[1], [0], [0], [1], [0, 0, 1, 1], [], []>} : vector<4x4xf32>, vector<4x290xf32>, vector<4x290xf32> -> vector<4x290xf32>
    %85 = arith.addf %80, %84 : vector<4x290xf32>
    %86 = vector.extract_strided_slice %1 {offsets = [0, 34], sizes = [4, 290], strides = [1, 1]} : vector<4x324xf32> to vector<4x290xf32>
    %cst_36 = arith.constant 0.000000e+00 : f32
    %87 = vector.shape_cast %24 : vector<1x290xi1> to vector<1x290xi1>
    %88 = vector.broadcast %87 : vector<1x290xi1> to vector<4x290xi1>
    %89 = vector.broadcast %cst_36 : f32 to vector<4x290xf32>
    %90 = arith.select %88, %86, %89 : vector<4x290xi1>, vector<4x290xf32>
    %c8 = arith.constant 8 : index
    %c0_37 = arith.constant 0 : index
    %c0_38 = arith.constant 0 : index
    %91 = vector.load %arg2[%c8, %c0_37, %c0_38] : memref<9x4x4xf32, #tpu.memory_space<vmem>>, vector<1x4x4xf32>
    %92 = vector.shape_cast %91 : vector<1x4x4xf32> to vector<4x4xf32>
    %cst_39 = arith.constant dense<0.000000e+00> : vector<4x290xf32>
    %93 = tpu.matmul %92, %90, %cst_39 {dimension_numbers = #tpu.dot_dimension_numbers<[1], [0], [0], [1], [0, 0, 1, 1], [], []>} : vector<4x4xf32>, vector<4x290xf32>, vector<4x290xf32> -> vector<4x290xf32>
    %94 = arith.addf %85, %93 : vector<4x290xf32>
    %c0_40 = arith.constant 0 : index
    %c0_41 = arith.constant 0 : index
    %95 = vector.load %arg3[%c0_40, %c0_41] : memref<4x1xf32, #tpu.memory_space<vmem>>, vector<4x1xf32>
    %96 = vector.broadcast %95 : vector<4x1xf32> to vector<4x290xf32>
    %97 = arith.addf %94, %96 : vector<4x290xf32>
    %cst_42 = arith.constant 0.000000e+00 : f32
    %98 = vector.broadcast %cst_42 : f32 to vector<4x290xf32>
    %99 = arith.maximumf %97, %98 : vector<4x290xf32>
    %c17_i32 = arith.constant 17 : i32
    %100 = vector.broadcast %c17_i32 : i32 to vector<1x290xi32>
    %101 = arith.cmpi sge, %2, %100 : vector<1x290xi32>
    %c273_i32 = arith.constant 273 : i32
    %102 = vector.broadcast %c273_i32 : i32 to vector<1x290xi32>
    %103 = arith.cmpi slt, %2, %102 : vector<1x290xi32>
    %104 = arith.andi %101, %103 : vector<1x290xi1>
    %cst_43 = arith.constant 0.000000e+00 : f32
    %105 = vector.shape_cast %104 : vector<1x290xi1> to vector<1x290xi1>
    %106 = vector.broadcast %105 : vector<1x290xi1> to vector<4x290xi1>
    %107 = vector.broadcast %cst_43 : f32 to vector<4x290xf32>
    %108 = arith.select %106, %99, %107 : vector<4x290xi1>, vector<4x290xf32>
    %109 = tpu.iota {dimensions = array<i32: 1>} : vector<1x256xi32>
    %c16_i32_44 = arith.constant 16 : i32
    %c0_i32_45 = arith.constant 0 : i32
    %110 = arith.cmpi eq, %c16_i32_44, %c0_i32_45 : i32
    %c1_i32_46 = arith.constant 1 : i32
    %111 = arith.select %110, %c1_i32_46, %c16_i32_44 : i32
    %112 = vector.broadcast %111 : i32 to vector<1x256xi32>
    %113 = arith.remsi %109, %112 : vector<1x256xi32>
    %c0_i32_47 = arith.constant 0 : i32
    %114 = vector.broadcast %c0_i32_47 : i32 to vector<1x256xi32>
    %115 = arith.cmpi ne, %113, %114 : vector<1x256xi32>
    %c0_i32_48 = arith.constant 0 : i32
    %116 = vector.broadcast %c0_i32_48 : i32 to vector<1x256xi32>
    %117 = arith.cmpi slt, %113, %116 : vector<1x256xi32>
    %c0_i32_49 = arith.constant 0 : i32
    %118 = arith.cmpi slt, %111, %c0_i32_49 : i32
    %119 = vector.broadcast %118 : i1 to vector<1x256xi1>
    %120 = vector.broadcast %119 : vector<1x256xi1> to vector<1x256xi1>
    %121 = arith.xori %117, %120 : vector<1x256xi1>
    %122 = arith.andi %121, %115 : vector<1x256xi1>
    %123 = vector.broadcast %111 : i32 to vector<1x256xi32>
    %124 = arith.addi %113, %123 : vector<1x256xi32>
    %125 = arith.select %122, %124, %113 : vector<1x256xi1>, vector<1x256xi32>
    %c1_i32_50 = arith.constant 1 : i32
    %126 = vector.broadcast %c1_i32_50 : i32 to vector<1x256xi32>
    %127 = arith.cmpi sge, %125, %126 : vector<1x256xi32>
    %c14_i32_51 = arith.constant 14 : i32
    %128 = vector.broadcast %c14_i32_51 : i32 to vector<1x256xi32>
    %129 = arith.cmpi sle, %125, %128 : vector<1x256xi32>
    %cst_52 = arith.constant 0.000000e+00 : f32
    %130 = vector.broadcast %cst_52 : f32 to vector<4x256xf32>
    %131 = vector.extract_strided_slice %108 {offsets = [0, 0], sizes = [4, 256], strides = [1, 1]} : vector<4x290xf32> to vector<4x256xf32>
    %cst_53 = arith.constant 0.000000e+00 : f32
    %132 = vector.shape_cast %127 : vector<1x256xi1> to vector<1x256xi1>
    %133 = vector.broadcast %132 : vector<1x256xi1> to vector<4x256xi1>
    %134 = vector.broadcast %cst_53 : f32 to vector<4x256xf32>
    %135 = arith.select %133, %131, %134 : vector<4x256xi1>, vector<4x256xf32>
    %c0_54 = arith.constant 0 : index
    %c0_55 = arith.constant 0 : index
    %c0_56 = arith.constant 0 : index
    %136 = vector.load %arg4[%c0_54, %c0_55, %c0_56] : memref<9x4x4xf32, #tpu.memory_space<vmem>>, vector<1x4x4xf32>
    %137 = vector.shape_cast %136 : vector<1x4x4xf32> to vector<4x4xf32>
    %cst_57 = arith.constant dense<0.000000e+00> : vector<4x256xf32>
    %138 = tpu.matmul %137, %135, %cst_57 {dimension_numbers = #tpu.dot_dimension_numbers<[1], [0], [0], [1], [0, 0, 1, 1], [], []>} : vector<4x4xf32>, vector<4x256xf32>, vector<4x256xf32> -> vector<4x256xf32>
    %139 = arith.addf %130, %138 : vector<4x256xf32>
    %140 = vector.extract_strided_slice %108 {offsets = [0, 1], sizes = [4, 256], strides = [1, 1]} : vector<4x290xf32> to vector<4x256xf32>
    %c1_58 = arith.constant 1 : index
    %c0_59 = arith.constant 0 : index
    %c0_60 = arith.constant 0 : index
    %141 = vector.load %arg4[%c1_58, %c0_59, %c0_60] : memref<9x4x4xf32, #tpu.memory_space<vmem>>, vector<1x4x4xf32>
    %142 = vector.shape_cast %141 : vector<1x4x4xf32> to vector<4x4xf32>
    %cst_61 = arith.constant dense<0.000000e+00> : vector<4x256xf32>
    %143 = tpu.matmul %142, %140, %cst_61 {dimension_numbers = #tpu.dot_dimension_numbers<[1], [0], [0], [1], [0, 0, 1, 1], [], []>} : vector<4x4xf32>, vector<4x256xf32>, vector<4x256xf32> -> vector<4x256xf32>
    %144 = arith.addf %139, %143 : vector<4x256xf32>
    %145 = vector.extract_strided_slice %108 {offsets = [0, 2], sizes = [4, 256], strides = [1, 1]} : vector<4x290xf32> to vector<4x256xf32>
    %cst_62 = arith.constant 0.000000e+00 : f32
    %146 = vector.shape_cast %129 : vector<1x256xi1> to vector<1x256xi1>
    %147 = vector.broadcast %146 : vector<1x256xi1> to vector<4x256xi1>
    %148 = vector.broadcast %cst_62 : f32 to vector<4x256xf32>
    %149 = arith.select %147, %145, %148 : vector<4x256xi1>, vector<4x256xf32>
    %c2_63 = arith.constant 2 : index
    %c0_64 = arith.constant 0 : index
    %c0_65 = arith.constant 0 : index
    %150 = vector.load %arg4[%c2_63, %c0_64, %c0_65] : memref<9x4x4xf32, #tpu.memory_space<vmem>>, vector<1x4x4xf32>
    %151 = vector.shape_cast %150 : vector<1x4x4xf32> to vector<4x4xf32>
    %cst_66 = arith.constant dense<0.000000e+00> : vector<4x256xf32>
    %152 = tpu.matmul %151, %149, %cst_66 {dimension_numbers = #tpu.dot_dimension_numbers<[1], [0], [0], [1], [0, 0, 1, 1], [], []>} : vector<4x4xf32>, vector<4x256xf32>, vector<4x256xf32> -> vector<4x256xf32>
    %153 = arith.addf %144, %152 : vector<4x256xf32>
    %154 = vector.extract_strided_slice %108 {offsets = [0, 16], sizes = [4, 256], strides = [1, 1]} : vector<4x290xf32> to vector<4x256xf32>
    %cst_67 = arith.constant 0.000000e+00 : f32
    %155 = vector.shape_cast %127 : vector<1x256xi1> to vector<1x256xi1>
    %156 = vector.broadcast %155 : vector<1x256xi1> to vector<4x256xi1>
    %157 = vector.broadcast %cst_67 : f32 to vector<4x256xf32>
    %158 = arith.select %156, %154, %157 : vector<4x256xi1>, vector<4x256xf32>
    %c3_68 = arith.constant 3 : index
    %c0_69 = arith.constant 0 : index
    %c0_70 = arith.constant 0 : index
    %159 = vector.load %arg4[%c3_68, %c0_69, %c0_70] : memref<9x4x4xf32, #tpu.memory_space<vmem>>, vector<1x4x4xf32>
    %160 = vector.shape_cast %159 : vector<1x4x4xf32> to vector<4x4xf32>
    %cst_71 = arith.constant dense<0.000000e+00> : vector<4x256xf32>
    %161 = tpu.matmul %160, %158, %cst_71 {dimension_numbers = #tpu.dot_dimension_numbers<[1], [0], [0], [1], [0, 0, 1, 1], [], []>} : vector<4x4xf32>, vector<4x256xf32>, vector<4x256xf32> -> vector<4x256xf32>
    %162 = arith.addf %153, %161 : vector<4x256xf32>
    %163 = vector.extract_strided_slice %108 {offsets = [0, 17], sizes = [4, 256], strides = [1, 1]} : vector<4x290xf32> to vector<4x256xf32>
    %c4_72 = arith.constant 4 : index
    %c0_73 = arith.constant 0 : index
    %c0_74 = arith.constant 0 : index
    %164 = vector.load %arg4[%c4_72, %c0_73, %c0_74] : memref<9x4x4xf32, #tpu.memory_space<vmem>>, vector<1x4x4xf32>
    %165 = vector.shape_cast %164 : vector<1x4x4xf32> to vector<4x4xf32>
    %cst_75 = arith.constant dense<0.000000e+00> : vector<4x256xf32>
    %166 = tpu.matmul %165, %163, %cst_75 {dimension_numbers = #tpu.dot_dimension_numbers<[1], [0], [0], [1], [0, 0, 1, 1], [], []>} : vector<4x4xf32>, vector<4x256xf32>, vector<4x256xf32> -> vector<4x256xf32>
    %167 = arith.addf %162, %166 : vector<4x256xf32>
    %168 = vector.extract_strided_slice %108 {offsets = [0, 18], sizes = [4, 256], strides = [1, 1]} : vector<4x290xf32> to vector<4x256xf32>
    %cst_76 = arith.constant 0.000000e+00 : f32
    %169 = vector.shape_cast %129 : vector<1x256xi1> to vector<1x256xi1>
    %170 = vector.broadcast %169 : vector<1x256xi1> to vector<4x256xi1>
    %171 = vector.broadcast %cst_76 : f32 to vector<4x256xf32>
    %172 = arith.select %170, %168, %171 : vector<4x256xi1>, vector<4x256xf32>
    %c5_77 = arith.constant 5 : index
    %c0_78 = arith.constant 0 : index
    %c0_79 = arith.constant 0 : index
    %173 = vector.load %arg4[%c5_77, %c0_78, %c0_79] : memref<9x4x4xf32, #tpu.memory_space<vmem>>, vector<1x4x4xf32>
    %174 = vector.shape_cast %173 : vector<1x4x4xf32> to vector<4x4xf32>
    %cst_80 = arith.constant dense<0.000000e+00> : vector<4x256xf32>
    %175 = tpu.matmul %174, %172, %cst_80 {dimension_numbers = #tpu.dot_dimension_numbers<[1], [0], [0], [1], [0, 0, 1, 1], [], []>} : vector<4x4xf32>, vector<4x256xf32>, vector<4x256xf32> -> vector<4x256xf32>
    %176 = arith.addf %167, %175 : vector<4x256xf32>
    %177 = vector.extract_strided_slice %108 {offsets = [0, 32], sizes = [4, 256], strides = [1, 1]} : vector<4x290xf32> to vector<4x256xf32>
    %cst_81 = arith.constant 0.000000e+00 : f32
    %178 = vector.shape_cast %127 : vector<1x256xi1> to vector<1x256xi1>
    %179 = vector.broadcast %178 : vector<1x256xi1> to vector<4x256xi1>
    %180 = vector.broadcast %cst_81 : f32 to vector<4x256xf32>
    %181 = arith.select %179, %177, %180 : vector<4x256xi1>, vector<4x256xf32>
    %c6_82 = arith.constant 6 : index
    %c0_83 = arith.constant 0 : index
    %c0_84 = arith.constant 0 : index
    %182 = vector.load %arg4[%c6_82, %c0_83, %c0_84] : memref<9x4x4xf32, #tpu.memory_space<vmem>>, vector<1x4x4xf32>
    %183 = vector.shape_cast %182 : vector<1x4x4xf32> to vector<4x4xf32>
    %cst_85 = arith.constant dense<0.000000e+00> : vector<4x256xf32>
    %184 = tpu.matmul %183, %181, %cst_85 {dimension_numbers = #tpu.dot_dimension_numbers<[1], [0], [0], [1], [0, 0, 1, 1], [], []>} : vector<4x4xf32>, vector<4x256xf32>, vector<4x256xf32> -> vector<4x256xf32>
    %185 = arith.addf %176, %184 : vector<4x256xf32>
    %186 = vector.extract_strided_slice %108 {offsets = [0, 33], sizes = [4, 256], strides = [1, 1]} : vector<4x290xf32> to vector<4x256xf32>
    %c7_86 = arith.constant 7 : index
    %c0_87 = arith.constant 0 : index
    %c0_88 = arith.constant 0 : index
    %187 = vector.load %arg4[%c7_86, %c0_87, %c0_88] : memref<9x4x4xf32, #tpu.memory_space<vmem>>, vector<1x4x4xf32>
    %188 = vector.shape_cast %187 : vector<1x4x4xf32> to vector<4x4xf32>
    %cst_89 = arith.constant dense<0.000000e+00> : vector<4x256xf32>
    %189 = tpu.matmul %188, %186, %cst_89 {dimension_numbers = #tpu.dot_dimension_numbers<[1], [0], [0], [1], [0, 0, 1, 1], [], []>} : vector<4x4xf32>, vector<4x256xf32>, vector<4x256xf32> -> vector<4x256xf32>
    %190 = arith.addf %185, %189 : vector<4x256xf32>
    %191 = vector.extract_strided_slice %108 {offsets = [0, 34], sizes = [4, 256], strides = [1, 1]} : vector<4x290xf32> to vector<4x256xf32>
    %cst_90 = arith.constant 0.000000e+00 : f32
    %192 = vector.shape_cast %129 : vector<1x256xi1> to vector<1x256xi1>
    %193 = vector.broadcast %192 : vector<1x256xi1> to vector<4x256xi1>
    %194 = vector.broadcast %cst_90 : f32 to vector<4x256xf32>
    %195 = arith.select %193, %191, %194 : vector<4x256xi1>, vector<4x256xf32>
    %c8_91 = arith.constant 8 : index
    %c0_92 = arith.constant 0 : index
    %c0_93 = arith.constant 0 : index
    %196 = vector.load %arg4[%c8_91, %c0_92, %c0_93] : memref<9x4x4xf32, #tpu.memory_space<vmem>>, vector<1x4x4xf32>
    %197 = vector.shape_cast %196 : vector<1x4x4xf32> to vector<4x4xf32>
    %cst_94 = arith.constant dense<0.000000e+00> : vector<4x256xf32>
    %198 = tpu.matmul %197, %195, %cst_94 {dimension_numbers = #tpu.dot_dimension_numbers<[1], [0], [0], [1], [0, 0, 1, 1], [], []>} : vector<4x4xf32>, vector<4x256xf32>, vector<4x256xf32> -> vector<4x256xf32>
    %199 = arith.addf %190, %198 : vector<4x256xf32>
    %c0_95 = arith.constant 0 : index
    %c0_96 = arith.constant 0 : index
    %200 = vector.load %arg5[%c0_95, %c0_96] : memref<4x1xf32, #tpu.memory_space<vmem>>, vector<4x1xf32>
    %201 = vector.broadcast %200 : vector<4x1xf32> to vector<4x256xf32>
    %202 = arith.addf %199, %201 : vector<4x256xf32>
    %203 = vector.extract_strided_slice %1 {offsets = [0, 34], sizes = [4, 256], strides = [1, 1]} : vector<4x324xf32> to vector<4x256xf32>
    %204 = arith.addf %202, %203 : vector<4x256xf32>
    %c0_97 = arith.constant 0 : index
    %c0_98 = arith.constant 0 : index
    %c0_99 = arith.constant 0 : index
    %205 = vector.load %arg6[%c0_97, %c0_98, %c0_99] : memref<1x4x256xf32, #tpu.memory_space<vmem>>, vector<1x4x256xf32>
    %206 = vector.shape_cast %205 : vector<1x4x256xf32> to vector<4x256xf32>
    %207 = vector.shape_cast %204 : vector<4x256xf32> to vector<1x4x256xf32>
    tpu.vector_store %arg6[%c0_97, %c0_98, %c0_99], %207 {strides = array<i32>} : memref<1x4x256xf32, #tpu.memory_space<vmem>>, vector<1x4x256xf32>,
    return
  }
  func.func @transform_0(%arg0: i32) -> (i32, i32, i32) {
    %c0_i32 = arith.constant 0 : i32
    %c0_i32_0 = arith.constant 0 : i32
    %c0_i32_1 = arith.constant 0 : i32
    return %arg0, %c0_i32, %c0_i32_0 : i32, i32, i32
  }
  func.func @transform_1(%arg0: i32) -> (i32, i32, i32) {
    %c0_i32 = arith.constant 0 : i32
    %c0_i32_0 = arith.constant 0 : i32
    %c0_i32_1 = arith.constant 0 : i32
    %c0_i32_2 = arith.constant 0 : i32
    return %c0_i32, %c0_i32_0, %c0_i32_1 : i32, i32, i32
  }
  func.func @transform_2(%arg0: i32) -> (i32, i32) {
    %c0_i32 = arith.constant 0 : i32
    %c0_i32_0 = arith.constant 0 : i32
    %c0_i32_1 = arith.constant 0 : i32
    return %c0_i32, %c0_i32_0 : i32, i32
  }
  func.func @transform_3(%arg0: i32) -> (i32, i32, i32) {
    %c0_i32 = arith.constant 0 : i32
    %c0_i32_0 = arith.constant 0 : i32
    %c0_i32_1 = arith.constant 0 : i32
    %c0_i32_2 = arith.constant 0 : i32
    return %c0_i32, %c0_i32_0, %c0_i32_1 : i32, i32, i32
  }
  func.func @transform_4(%arg0: i32) -> (i32, i32) {
    %c0_i32 = arith.constant 0 : i32
    %c0_i32_0 = arith.constant 0 : i32
    %c0_i32_1 = arith.constant 0 : i32
    return %c0_i32, %c0_i32_0 : i32, i32
  }
  func.func @transform_5(%arg0: i32) -> (i32, i32, i32) {
    %c0_i32 = arith.constant 0 : i32
    %c0_i32_0 = arith.constant 0 : i32
    %c0_i32_1 = arith.constant 0 : i32
    return %arg0, %c0_i32, %c0_i32_0 : i32, i32, i32
  }
}

</mosaic_0001>

<llo_original>
// kernel: tpu_custom_call.1
$region0: #{tpu_custom_call.1}
  #allocation0 [shape = 'u32[]', space=smem, size = 0x4, offset = 0x4, fixed_abs, tag = 'smem constant byte address 0x4 - core index']
  #allocation1 [shape = 'u32[72,128]{1,0:T(1,128)}', space=vmem, size = 0x9000, scoped, tag = 'internal scratch']
  %s0 = inlined_call_operand.vmem [shape: f32[2,4,324], index: 0, kind: input, shape index: {}]
  %s1 = inlined_call_operand.vmem [shape: f32[9,4,4], index: 1, kind: input, shape index: {}]
  %s2 = inlined_call_operand.vmem [shape: f32[4,1], index: 2, kind: input, shape index: {}]
  %s3 = inlined_call_operand.vmem [shape: f32[9,4,4], index: 3, kind: input, shape index: {}]
  %s4 = inlined_call_operand.vmem [shape: f32[4,1], index: 4, kind: input, shape index: {}]
  %s5 = inlined_call_operand.hbm [shape: f32[2,4,256], index: 5, kind: output, shape index: {}]
  %s6 = sld [smem:[#allocation0]]
  $region53: #{tpu_custom_call.1} parent=0
    _
  %s8 = ssub.s32 1, %s6
  %s9 = scalar_select 0, %s8, %s6
  $region1: #{tpu_custom_call.1} parent=0
    #allocation2 [shape = 'u8[8192]{0}', space=vmem, size = 0x2000, scoped, tag = 'output window, operand 0']
    #allocation3 [shape = 's32[2]{0}', space=sflag, size = 0x8, scoped, tag = 'scoped memory for tpu_custom_call.1']
    %10 = vsyncpa [#allocation3], 0
    %s11 = scalar_lea.sflag [#allocation3], 1
    %12 = vsyncpa %s11, 0
    loop: start=0, step=1, limit=4
    $region2: #{tpu_custom_call.1} parent=1 // loop_pre_header
      _
    $region3: #{tpu_custom_call.1} parent=1 // loop_header
      %s14 = sphi 0, %s18
      %p15 = scmp.ge.s32.totalorder %s14, 4
      %s24 = sphi 0, %s26
      %s27 = sphi 0, %s24
      %s28 = sphi 0, %s27
      %s44 = sphi 0, %s28
      %s48 = sphi 0, %s48
      %s50 = sphi 0, %s48
      %s51 = sphi 0, %s50
      %s65 = sphi 0, %s51
      %s69 = sphi 0, %s69
      %s71 = sphi 0, %s69
      %s72 = sphi 0, %s71
      %s86 = sphi 0, %s72
      %s90 = sphi 0, %s90
      %s92 = sphi 0, %s90
      %s93 = sphi 0, %s92
      %s107 = sphi 0, %s93
      %s111 = sphi 0, %s111
      %s113 = sphi 0, %s111
      %s114 = sphi 0, %s113
      %s128 = sphi 0, %s114
      %s134 = sphi 0, %s136
      %s137 = sphi 0, %s134
      %s138 = sphi 0, %s137
      %s154 = sphi 0, %s138
    $region4: #{tpu_custom_call.1} parent=1 // loop_header_branch
      %17 = sbr.rel (%p15) target = $region8
    $region5: #{tpu_custom_call.1} parent=1 // loop_body
      %s19 = ssub.s32 %s14, 1
      %s20 = ssub.s32 %s14, 2
      %s21 = sadd.s32 %s14, 1
      %s22 = ssub.s32 %s14, %s21
      %p23 = scmp.eq.s32.totalorder %s22, 0
      %s25 = sadd.s32 %s24, 1
      %s26 = scalar_select %p23, %s24, %s25
      %p29 = pneg %p23
      %p30 = scmp.eq.s32.totalorder %s14, 1
      %p31 = por %p29, %p30
      %p32 = scmp.ne.s32.totalorder %s24, %s27
      %p33 = scmp.eq.s32.totalorder %s14, 0
      %p34 = por %p32, %p33
      %p35 = scmp.ne.s32.totalorder %s24, %s27
      %p36 = scmp.eq.s32.totalorder %s19, 1
      %p37 = por %p35, %p36
      %p38 = scmp.ne.s32.totalorder %s27, %s28
      %p39 = scmp.eq.s32.totalorder %s19, 0
      %p40 = por %p38, %p39
      %p41 = scmp.ne.s32.totalorder %s27, %s28
      %p42 = scmp.eq.s32.totalorder %s20, 1
      %p43 = por %p41, %p42
      %p45 = scmp.ne.s32.totalorder %s28, %s44
      %p46 = scmp.eq.s32.totalorder %s20, 0
      %p47 = por %p45, %p46
      %s49 = sadd.s32 %s48, 1
      %p52 = scmp.eq.s32.totalorder %s14, 1
      %p53 = scmp.ne.s32.totalorder %s48, %s50
      %p54 = scmp.eq.s32.totalorder %s14, 0
      %p55 = por %p53, %p54
      %p56 = scmp.ne.s32.totalorder %s48, %s50
      %p57 = scmp.eq.s32.totalorder %s19, 1
      %p58 = por %p56, %p57
      %p59 = scmp.ne.s32.totalorder %s50, %s51
      %p60 = scmp.eq.s32.totalorder %s19, 0
      %p61 = por %p59, %p60
      %p62 = scmp.ne.s32.totalorder %s50, %s51
      %p63 = scmp.eq.s32.totalorder %s20, 1
      %p64 = por %p62, %p63
      %p66 = scmp.ne.s32.totalorder %s51, %s65
      %p67 = scmp.eq.s32.totalorder %s20, 0
      %p68 = por %p66, %p67
      %s70 = sadd.s32 %s69, 1
      %p73 = scmp.eq.s32.totalorder %s14, 1
      %p74 = scmp.ne.s32.totalorder %s69, %s71
      %p75 = scmp.eq.s32.totalorder %s14, 0
      %p76 = por %p74, %p75
      %p77 = scmp.ne.s32.totalorder %s69, %s71
      %p78 = scmp.eq.s32.totalorder %s19, 1
      %p79 = por %p77, %p78
      %p80 = scmp.ne.s32.totalorder %s71, %s72
      %p81 = scmp.eq.s32.totalorder %s19, 0
      %p82 = por %p80, %p81
      %p83 = scmp.ne.s32.totalorder %s71, %s72
      %p84 = scmp.eq.s32.totalorder %s20, 1
      %p85 = por %p83, %p84
      %p87 = scmp.ne.s32.totalorder %s72, %s86
      %p88 = scmp.eq.s32.totalorder %s20, 0
      %p89 = por %p87, %p88
      %s91 = sadd.s32 %s90, 1
      %p94 = scmp.eq.s32.totalorder %s14, 1
      %p95 = scmp.ne.s32.totalorder %s90, %s92
      %p96 = scmp.eq.s32.totalorder %s14, 0
      %p97 = por %p95, %p96
      %p98 = scmp.ne.s32.totalorder %s90, %s92
      %p99 = scmp.eq.s32.totalorder %s19, 1
      %p100 = por %p98, %p99
      %p101 = scmp.ne.s32.totalorder %s92, %s93
      %p102 = scmp.eq.s32.totalorder %s19, 0
      %p103 = por %p101, %p102
      %p104 = scmp.ne.s32.totalorder %s92, %s93
      %p105 = scmp.eq.s32.totalorder %s20, 1
      %p106 = por %p104, %p105
      %p108 = scmp.ne.s32.totalorder %s93, %s107
      %p109 = scmp.eq.s32.totalorder %s20, 0
      %p110 = por %p108, %p109
      %s112 = sadd.s32 %s111, 1
      %p115 = scmp.eq.s32.totalorder %s14, 1
      %p116 = scmp.ne.s32.totalorder %s111, %s113
      %p117 = scmp.eq.s32.totalorder %s14, 0
      %p118 = por %p116, %p117
      %p119 = scmp.ne.s32.totalorder %s111, %s113
      %p120 = scmp.eq.s32.totalorder %s19, 1
      %p121 = por %p119, %p120
      %p122 = scmp.ne.s32.totalorder %s113, %s114
      %p123 = scmp.eq.s32.totalorder %s19, 0
      %p124 = por %p122, %p123
      %p125 = scmp.ne.s32.totalorder %s113, %s114
      %p126 = scmp.eq.s32.totalorder %s20, 1
      %p127 = por %p125, %p126
      %p129 = scmp.ne.s32.totalorder %s114, %s128
      %p130 = scmp.eq.s32.totalorder %s20, 0
      %p131 = por %p129, %p130
      %s132 = ssub.s32 %s14, %s21
      %p133 = scmp.eq.s32.totalorder %s132, 0
      %s135 = sadd.s32 %s134, 1
      %s136 = scalar_select %p133, %s134, %s135
      %p139 = pneg %p133
      %p140 = scmp.eq.s32.totalorder %s14, 1
      %p141 = por %p139, %p140
      %p142 = scmp.ne.s32.totalorder %s134, %s137
      %p143 = scmp.eq.s32.totalorder %s14, 0
      %p144 = por %p142, %p143
      %p145 = scmp.ne.s32.totalorder %s134, %s137
      %p146 = scmp.eq.s32.totalorder %s19, 1
      %p147 = por %p145, %p146
      %p148 = scmp.ne.s32.totalorder %s137, %s138
      %p149 = scmp.eq.s32.totalorder %s19, 0
      %p150 = por %p148, %p149
      %p151 = scmp.ne.s32.totalorder %s137, %s138
      %p152 = scmp.eq.s32.totalorder %s20, 1
      %p153 = por %p151, %p152
      %p155 = scmp.ne.s32.totalorder %s138, %s154
      %p156 = scmp.eq.s32.totalorder %s20, 0
      %p157 = por %p155, %p156
      %p158 = scmp.le.s32.totalorder 1, %s14
      %p159 = scmp.lt.s32.totalorder %s14, 3
      %p160 = pnand %p158, %p159
      %p161 = pneg %p160
      // Predicated region
      $region9: #{tpu_custom_call.1} parent=5 // pred_check
        _
      $region10: #{tpu_custom_call.1} parent=5 // pred_check_branch
        %163 = sbr.rel (%p160) target = $region12
      $region11: #{tpu_custom_call.1} parent=5 // pred_region
        %s164 = ssub.s32 %s14, 1
        // Predicated region
        $region13: #{tpu_custom_call.1} parent=11 // pred_check
          %p165 = pneg %p61
        $region14: #{tpu_custom_call.1} parent=11 // pred_check_branch
          %167 = sbr.rel (%p165) target = $region16
        $region15: #{tpu_custom_call.1} parent=11 // pred_region
          _
        $region16: #{tpu_custom_call.1} parent=11 // pred_fallthru
          _
        // Predicated region
        $region17: #{tpu_custom_call.1} parent=11 // pred_check
          %p168 = pneg %p82
        $region18: #{tpu_custom_call.1} parent=11 // pred_check_branch
          %170 = sbr.rel (%p168) target = $region20
        $region19: #{tpu_custom_call.1} parent=11 // pred_region
          _
        $region20: #{tpu_custom_call.1} parent=11 // pred_fallthru
          _
        // Predicated region
        $region21: #{tpu_custom_call.1} parent=11 // pred_check
          %p171 = pneg %p103
        $region22: #{tpu_custom_call.1} parent=11 // pred_check_branch
          %173 = sbr.rel (%p171) target = $region24
        $region23: #{tpu_custom_call.1} parent=11 // pred_region
          _
        $region24: #{tpu_custom_call.1} parent=11 // pred_fallthru
          _
        // Predicated region
        $region25: #{tpu_custom_call.1} parent=11 // pred_check
          %p174 = pneg %p124
        $region26: #{tpu_custom_call.1} parent=11 // pred_check_branch
          %176 = sbr.rel (%p174) target = $region28
        $region27: #{tpu_custom_call.1} parent=11 // pred_region
          _
        $region28: #{tpu_custom_call.1} parent=11 // pred_fallthru
          _
      $region12: #{tpu_custom_call.1} parent=5 // pred_fallthru
        _
      %p177 = scmp.lt.s32.totalorder %s14, 2
      // Predicated region
      $region29: #{tpu_custom_call.1} parent=5 // pred_check
        %p178 = pneg %p177
      $region30: #{tpu_custom_call.1} parent=5 // pred_check_branch
        %180 = sbr.rel (%p178) target = $region32
      $region31: #{tpu_custom_call.1} parent=5 // pred_region
        // Predicated region
        $region33: #{tpu_custom_call.1} parent=31 // pred_check
          %p181 = pneg %p34
        $region34: #{tpu_custom_call.1} parent=31 // pred_check_branch
          %183 = sbr.rel (%p181) target = $region36
        $region35: #{tpu_custom_call.1} parent=31 // pred_region
          %p184 = scmp.lt.s32.totalorder %s14, 1
          %s185 = scalar_select %p184, %s14, 1
          %s186 = smul.addr %s185, 3
          %s187 = smul.addr %s186, 4
          %s188 = scalar_lea.vmem %s0, %s187
        $region36: #{tpu_custom_call.1} parent=31 // pred_fallthru
          _
      $region32: #{tpu_custom_call.1} parent=5 // pred_fallthru
        _
      %p189 = scmp.le.s32.totalorder 1, %s14
      %p190 = scmp.lt.s32.totalorder %s14, 3
      %p191 = pnand %p189, %p190
      %p192 = pneg %p191
      // Predicated region
      $region37: #{tpu_custom_call.1} parent=5 // pred_check
        _
      $region38: #{tpu_custom_call.1} parent=5 // pred_check_branch
        %194 = sbr.rel (%p191) target = $region40
      $region39: #{tpu_custom_call.1} parent=5 // pred_region
        %s195 = ssub.s32 %s14, 1
        %p196 = scmp.lt.s32.totalorder %s19, 1
        %s197 = scalar_select %p196, %s19, 1
        %s198 = smul.addr %s197, 3
        %s199 = smul.addr %s198, 4
        %s200 = scalar_lea.vmem %s0, %s199
        %p201 = pneg %p40
        %p202 = pneg %p37
        %p203 = pneg %p61
        %p204 = pneg %p58
        %p205 = pneg %p82
        %p206 = pneg %p79
        %p207 = pneg %p103
        %p208 = pneg %p100
        %p209 = pneg %p124
        %p210 = pneg %p121
        %p211 = pneg %p150
        %p212 = pneg %p147
        %s213 = sand.u32 %s137, 1
        %s214 = scalar_lea.sflag [#allocation3], %s213
        %s215 = sand.u32 %s137, 1
        %s216 = smul.addr %s215, 8
        %s217 = scalar_lea.vmem [#allocation2], %s216
        %p218 = scmp.lt.s32.totalorder %s19, 1
        %s219 = scalar_select %p218, %s19, 1
        %s220 = smul.addr %s219, 3
        %s221 = smul.addr %s220, 4
        %s222 = scalar_lea.vmem %s0, %s221
        %v223 = vld [vmem:[%s222] sm:$0xff]
        %v224 = vld [vmem:[%s222 + $0x8] sm:$0xf]
        %v225 = vlaneseq
        %v226 = vand.u32 %v225, 127
        %v227 = vadd.s32 %v226, 128
        %v228 = vadd.s32 %v226, 256
        %v229 = vadd.s32 %v226, 15
        %v230 = vadd.s32 %v227, 15
        %v231 = vadd.s32 %v228, 15
        %vm232 = vcmp.lt.s32.totalorder %v229, 0
        %v233 = vsub.s32 0, %v229
        %v234 = vsel %vm232, %v233, %v229
        %v235 = vshrl.u32 %v234, 4
        %v236 = vand.u32 %v234, 15
        %v237 = vsub.s32 0, %v236
        %v238 = vsel %vm232, %v237, %v236
        %vm239 = vcmp.lt.s32.totalorder %v230, 0
        %v240 = vsub.s32 0, %v230
        %v241 = vsel %vm239, %v240, %v230
        %v242 = vshrl.u32 %v241, 4
        %v243 = vand.u32 %v241, 15
        %v244 = vsub.s32 0, %v243
        %v245 = vsel %vm239, %v244, %v243
        %vm246 = vcmp.lt.s32.totalorder %v231, 0
        %v247 = vsub.s32 0, %v231
        %v248 = vsel %vm246, %v247, %v231
        %v249 = vshrl.u32 %v248, 4
        %v250 = vand.u32 %v248, 15
        %v251 = vsub.s32 0, %v250
        %v252 = vsel %vm246, %v251, %v250
        %vm253 = vcmp.ne.s32.totalorder %v238, 0
        %vm254 = vcmp.ne.s32.totalorder %v245, 0
        %vm255 = vcmp.ne.s32.totalorder %v252, 0
        %vm256 = vcmp.lt.s32.totalorder %v238, 0
        %vm257 = vcmp.lt.s32.totalorder %v245, 0
        %vm258 = vcmp.lt.s32.totalorder %v252, 0
        %vm259 = vmand %vm256, %vm253
        %vm260 = vmand %vm257, %vm254
        %vm261 = vmand %vm258, %vm255
        %v262 = vadd.s32 %v238, 16
        %v263 = vadd.s32 %v245, 16
        %v264 = vadd.s32 %v252, 16
        %v265 = vsel %vm259, %v262, %v238
        %v266 = vsel %vm260, %v263, %v245
        %v267 = vsel %vm261, %v264, %v252
        %vm268 = vcmp.ge.s32.totalorder %v265, 1
        %vm269 = vcmp.ge.s32.totalorder %v266, 1
        %vm270 = vcmp.ge.s32.totalorder %v267, 1
        %vm271 = vcmp.le.s32.totalorder %v265, 14
        %vm272 = vcmp.le.s32.totalorder %v266, 14
        %vm273 = vcmp.le.s32.totalorder %v267, 14
        %v274 = vsel %vm268, 1, 0
        %v275 = vsel %vm269, 1, 0
        %v276 = vsel %vm270, 1, 0
        %vm277 = vcmp.eq.s32.totalorder %v274, 1
        %vm278 = vcmp.eq.s32.totalorder %v275, 1
        %vm279 = vcmp.eq.s32.totalorder %v276, 1
        %282 = vst [vmem:[#allocation1] ss:$2 sm:$0xff] %v223
        %s283 = scalar_lea.vmem [#allocation1], 16
        %284 = vst [vmem:[%s283] ss:$2 sm:$0xff] %v224
        %v285 = vld.sshfl [vmem:[#allocation1] sm:$0xff pattern:$0x75316420]
        %v286 = vld.sshfl [vmem:[#allocation1 + $0x8] sm:$0xff pattern:$0x75316420]
        %v287 = vld.sshfl [vmem:[#allocation1 + $0x10] sm:$0xff pattern:$0x75316420]
        %v291 = vsel %vm277, %v285, 0.0
        %v292 = vsel %vm278, %v286, 0.0
        %v293 = vsel %vm279, %v287, 0.0
        %v294 = vld [vmem:[%s1] sm:$0xf]
        %s295 = scalar_lea.vmem %s1, 4
        %v296 = vld [vmem:[%s295] sm:$0xf]
        %297 = vst [vmem:[#allocation1] ss:$2 sm:$0xff] %v223
        %s298 = scalar_lea.vmem [#allocation1], 16
        %299 = vst [vmem:[%s298] ss:$2 sm:$0xff] %v224
        %v300 = vld.sshfl [vmem:[#allocation1] sm:$0xff pattern:$0x75316420]
        %v301 = vld.sshfl [vmem:[#allocation1 + $0x8] sm:$0xff pattern:$0x75316420]
        %v302 = vld.sshfl [vmem:[#allocation1 + $0x10] sm:$0xff pattern:$0x75316420]
        %303 = vrot.lane.b32.xlu0 %v300, 127
        %v304 = vpop.permute.xlu0 %303
        %305 = vrot.lane.b32.xlu0 %v301, 127
        %v306 = vpop.permute.xlu0 %305
        %307 = vrot.lane.b32.xlu0 %v302, 127
        %v308 = vpop.permute.xlu0 %307
        %vm309 = vcmask 1039360
        %v310 = vsel %vm309, %v304, %v306
        %v311 = vsel %vm309, %v306, %v308
        %vm312 = vcmask 31744
        %v314 = vsel %vm312, %v296, 0
        %vm316 = vcmask 1043456
        %v317 = vsel %vm316, %v310, 0
        %v319 = vsel %vm316, %v311, 0
        %v321 = vsel %vm316, %v308, 0
        %323 = vmatpush.msra.mxu0 0.0
        %324 = vmatpush.msra.mxu0 0.0
        %325 = vmatpush.msra.mxu0 0.0
        %326 = vmatpush.msra.mxu0 0.0
        %327 = vmatpush.msra.mxu0 0.0
        %328 = vmatpush.msra.mxu0 0.0
        %329 = vmatpush.msra.mxu0 0.0
        %330 = vmatpush.msra.mxu0 0.0
        %331 = vmatpush.msra.mxu0 0.0
        %332 = vmatpush.msra.mxu0 0.0
        %333 = vmatpush.msra.mxu0 0.0
        %334 = vmatpush.msra.mxu0 0.0
        %335 = vmatpush.msra.mxu0 0.0
        %336 = vmatpush.msra.mxu0 0.0
        %337 = vmatpush.msra.mxu0 0.0
        %338 = vmatpush.msra.mxu0 %v317
        %339 = vmatmul.f32.gmra.mxu0 %v314
        %v340 = vpop.f32.mrf.mxu0
        %v341 = vadd.f32 0.0, %v340
        %342 = vdwg.mxu0
        %343 = vmatpush.msra.mxu0 0.0
        %344 = vmatpush.msra.mxu0 0.0
        %345 = vmatpush.msra.mxu0 0.0
        %346 = vmatpush.msra.mxu0 0.0
        %347 = vmatpush.msra.mxu0 0.0
        %348 = vmatpush.msra.mxu0 0.0
        %349 = vmatpush.msra.mxu0 0.0
        %350 = vmatpush.msra.mxu0 0.0
        %351 = vmatpush.msra.mxu0 0.0
        %352 = vmatpush.msra.mxu0 0.0
        %353 = vmatpush.msra.mxu0 0.0
        %354 = vmatpush.msra.mxu0 0.0
        %355 = vmatpush.msra.mxu0 0.0
        %356 = vmatpush.msra.mxu0 0.0
        %357 = vmatpush.msra.mxu0 0.0
        %358 = vmatpush.msra.mxu0 %v319
        %359 = vmatmul.f32.gmra.mxu0 %v314
        %v360 = vpop.f32.mrf.mxu0
        %v361 = vadd.f32 0.0, %v360
        %362 = vdwg.mxu0
        %363 = vmatpush.msra.mxu0 0.0
        %364 = vmatpush.msra.mxu0 0.0
        %365 = vmatpush.msra.mxu0 0.0
        %366 = vmatpush.msra.mxu0 0.0
        %367 = vmatpush.msra.mxu0 0.0
        %368 = vmatpush.msra.mxu0 0.0
        %369 = vmatpush.msra.mxu0 0.0
        %370 = vmatpush.msra.mxu0 0.0
        %371 = vmatpush.msra.mxu0 0.0
        %372 = vmatpush.msra.mxu0 0.0
        %373 = vmatpush.msra.mxu0 0.0
        %374 = vmatpush.msra.mxu0 0.0
        %375 = vmatpush.msra.mxu0 0.0
        %376 = vmatpush.msra.mxu0 0.0
        %377 = vmatpush.msra.mxu0 0.0
        %378 = vmatpush.msra.mxu0 %v321
        %379 = vmatmul.f32.gmra.mxu0 %v314
        %v380 = vpop.f32.mrf.mxu0
        %v381 = vadd.f32 0.0, %v380
        %382 = vdwg.mxu0
        %v384 = vsel %vm312, %v294, 0
        %v387 = vsel %vm316, %v291, 0
        %v390 = vsel %vm316, %v292, 0
        %v393 = vsel %vm316, %v293, 0
        %395 = vmatpush.msra.mxu0 0.0
        %396 = vmatpush.msra.mxu0 0.0
        %397 = vmatpush.msra.mxu0 0.0
        %398 = vmatpush.msra.mxu0 0.0
        %399 = vmatpush.msra.mxu0 0.0
        %400 = vmatpush.msra.mxu0 0.0
        %401 = vmatpush.msra.mxu0 0.0
        %402 = vmatpush.msra.mxu0 0.0
        %403 = vmatpush.msra.mxu0 0.0
        %404 = vmatpush.msra.mxu0 0.0
        %405 = vmatpush.msra.mxu0 0.0
        %406 = vmatpush.msra.mxu0 0.0
        %407 = vmatpush.msra.mxu0 0.0
        %408 = vmatpush.msra.mxu0 0.0
        %409 = vmatpush.msra.mxu0 0.0
        %410 = vmatpush.msra.mxu0 %v387
        %411 = vmatmul.f32.gmra.mxu0 %v384
        %v412 = vpop.f32.mrf.mxu0
        %v413 = vadd.f32 %v341, %v412
        %414 = vdwg.mxu0
        %415 = vmatpush.msra.mxu0 0.0
        %416 = vmatpush.msra.mxu0 0.0
        %417 = vmatpush.msra.mxu0 0.0
        %418 = vmatpush.msra.mxu0 0.0
        %419 = vmatpush.msra.mxu0 0.0
        %420 = vmatpush.msra.mxu0 0.0
        %421 = vmatpush.msra.mxu0 0.0
        %422 = vmatpush.msra.mxu0 0.0
        %423 = vmatpush.msra.mxu0 0.0
        %424 = vmatpush.msra.mxu0 0.0
        %425 = vmatpush.msra.mxu0 0.0
        %426 = vmatpush.msra.mxu0 0.0
        %427 = vmatpush.msra.mxu0 0.0
        %428 = vmatpush.msra.mxu0 0.0
        %429 = vmatpush.msra.mxu0 0.0
        %430 = vmatpush.msra.mxu0 %v390
        %431 = vmatmul.f32.gmra.mxu0 %v384
        %v432 = vpop.f32.mrf.mxu0
        %v433 = vadd.f32 %v361, %v432
        %434 = vdwg.mxu0
        %435 = vmatpush.msra.mxu0 0.0
        %436 = vmatpush.msra.mxu0 0.0
        %437 = vmatpush.msra.mxu0 0.0
        %438 = vmatpush.msra.mxu0 0.0
        %439 = vmatpush.msra.mxu0 0.0
        %440 = vmatpush.msra.mxu0 0.0
        %441 = vmatpush.msra.mxu0 0.0
        %442 = vmatpush.msra.mxu0 0.0
        %443 = vmatpush.msra.mxu0 0.0
        %444 = vmatpush.msra.mxu0 0.0
        %445 = vmatpush.msra.mxu0 0.0
        %446 = vmatpush.msra.mxu0 0.0
        %447 = vmatpush.msra.mxu0 0.0
        %448 = vmatpush.msra.mxu0 0.0
        %449 = vmatpush.msra.mxu0 0.0
        %450 = vmatpush.msra.mxu0 %v393
        %451 = vmatmul.f32.gmra.mxu0 %v384
        %v452 = vpop.f32.mrf.mxu0
        %v453 = vadd.f32 %v381, %v452
        %454 = vdwg.mxu0
        %v455 = vsel %vm271, 1, 0
        %v456 = vsel %vm272, 1, 0
        %v457 = vsel %vm273, 1, 0
        %vm458 = vcmp.eq.s32.totalorder %v455, 1
        %vm459 = vcmp.eq.s32.totalorder %v456, 1
        %vm460 = vcmp.eq.s32.totalorder %v457, 1
        %461 = vst [vmem:[#allocation1] ss:$2 sm:$0xff] %v223
        %s462 = scalar_lea.vmem [#allocation1], 16
        %463 = vst [vmem:[%s462] ss:$2 sm:$0xff] %v224
        %v464 = vld.sshfl [vmem:[#allocation1] sm:$0xff pattern:$0x75316420]
        %v465 = vld.sshfl [vmem:[#allocation1 + $0x8] sm:$0xff pattern:$0x75316420]
        %v466 = vld.sshfl [vmem:[#allocation1 + $0x10] sm:$0xff pattern:$0x75316420]
        %467 = vrot.lane.b32.xlu0 %v464, 126
        %v468 = vpop.permute.xlu0 %467
        %469 = vrot.lane.b32.xlu0 %v465, 126
        %v470 = vpop.permute.xlu0 %469
        %471 = vrot.lane.b32.xlu0 %v466, 126
        %v472 = vpop.permute.xlu0 %471
        %vm473 = vcmask 1031168
        %v474 = vsel %vm473, %v468, %v470
        %v475 = vsel %vm473, %v470, %v472
        %v479 = vsel %vm458, %v474, 0.0
        %v480 = vsel %vm459, %v475, 0.0
        %v481 = vsel %vm460, %v472, 0.0
        %s482 = scalar_lea.vmem %s1, 8
        %v483 = vld [vmem:[%s482] sm:$0xf]
        %v485 = vsel %vm312, %v483, 0
        %v488 = vsel %vm316, %v479, 0
        %v491 = vsel %vm316, %v480, 0
        %v494 = vsel %vm316, %v481, 0
        %496 = vmatpush.msra.mxu0 0.0
        %497 = vmatpush.msra.mxu0 0.0
        %498 = vmatpush.msra.mxu0 0.0
        %499 = vmatpush.msra.mxu0 0.0
        %500 = vmatpush.msra.mxu0 0.0
        %501 = vmatpush.msra.mxu0 0.0
        %502 = vmatpush.msra.mxu0 0.0
        %503 = vmatpush.msra.mxu0 0.0
        %504 = vmatpush.msra.mxu0 0.0
        %505 = vmatpush.msra.mxu0 0.0
        %506 = vmatpush.msra.mxu0 0.0
        %507 = vmatpush.msra.mxu0 0.0
        %508 = vmatpush.msra.mxu0 0.0
        %509 = vmatpush.msra.mxu0 0.0
        %510 = vmatpush.msra.mxu0 0.0
        %511 = vmatpush.msra.mxu0 %v488
        %512 = vmatmul.f32.gmra.mxu0 %v485
        %v513 = vpop.f32.mrf.mxu0
        %v514 = vadd.f32 0.0, %v513
        %515 = vdwg.mxu0
        %516 = vmatpush.msra.mxu0 0.0
        %517 = vmatpush.msra.mxu0 0.0
        %518 = vmatpush.msra.mxu0 0.0
        %519 = vmatpush.msra.mxu0 0.0
        %520 = vmatpush.msra.mxu0 0.0
        %521 = vmatpush.msra.mxu0 0.0
        %522 = vmatpush.msra.mxu0 0.0
        %523 = vmatpush.msra.mxu0 0.0
        %524 = vmatpush.msra.mxu0 0.0
        %525 = vmatpush.msra.mxu0 0.0
        %526 = vmatpush.msra.mxu0 0.0
        %527 = vmatpush.msra.mxu0 0.0
        %528 = vmatpush.msra.mxu0 0.0
        %529 = vmatpush.msra.mxu0 0.0
        %530 = vmatpush.msra.mxu0 0.0
        %531 = vmatpush.msra.mxu0 %v491
        %532 = vmatmul.f32.gmra.mxu0 %v485
        %v533 = vpop.f32.mrf.mxu0
        %v534 = vadd.f32 0.0, %v533
        %535 = vdwg.mxu0
        %536 = vmatpush.msra.mxu0 0.0
        %537 = vmatpush.msra.mxu0 0.0
        %538 = vmatpush.msra.mxu0 0.0
        %539 = vmatpush.msra.mxu0 0.0
        %540 = vmatpush.msra.mxu0 0.0
        %541 = vmatpush.msra.mxu0 0.0
        %542 = vmatpush.msra.mxu0 0.0
        %543 = vmatpush.msra.mxu0 0.0
        %544 = vmatpush.msra.mxu0 0.0
        %545 = vmatpush.msra.mxu0 0.0
        %546 = vmatpush.msra.mxu0 0.0
        %547 = vmatpush.msra.mxu0 0.0
        %548 = vmatpush.msra.mxu0 0.0
        %549 = vmatpush.msra.mxu0 0.0
        %550 = vmatpush.msra.mxu0 0.0
        %551 = vmatpush.msra.mxu0 %v494
        %552 = vmatmul.f32.gmra.mxu0 %v485
        %v553 = vpop.f32.mrf.mxu0
        %v554 = vadd.f32 0.0, %v553
        %555 = vdwg.mxu0
        %v556 = vadd.f32 %v413, %v514
        %v557 = vadd.f32 %v433, %v534
        %v558 = vadd.f32 %v453, %v554
        %559 = vst [vmem:[#allocation1] ss:$2 sm:$0xff] %v223
        %s560 = scalar_lea.vmem [#allocation1], 16
        %561 = vst [vmem:[%s560] ss:$2 sm:$0xff] %v224
        %v562 = vld.sshfl [vmem:[#allocation1] sm:$0xff pattern:$0x75316420]
        %v563 = vld.sshfl [vmem:[#allocation1 + $0x8] sm:$0xff pattern:$0x75316420]
        %v564 = vld.sshfl [vmem:[#allocation1 + $0x10] sm:$0xff pattern:$0x75316420]
        %565 = vrot.lane.b32.xlu0 %v562, 112
        %v566 = vpop.permute.xlu0 %565
        %567 = vrot.lane.b32.xlu0 %v563, 112
        %v568 = vpop.permute.xlu0 %567
        %569 = vrot.lane.b32.xlu0 %v564, 112
        %v570 = vpop.permute.xlu0 %569
        %vm571 = vcmask 916480
        %v572 = vsel %vm571, %v566, %v568
        %v573 = vsel %vm571, %v568, %v570
        %v577 = vsel %vm277, %v572, 0.0
        %v578 = vsel %vm278, %v573, 0.0
        %v579 = vsel %vm279, %v570, 0.0
        %s580 = scalar_lea.vmem %s1, 12
        %v581 = vld [vmem:[%s580] sm:$0xf]
        %v583 = vsel %vm312, %v581, 0
        %v586 = vsel %vm316, %v577, 0
        %v589 = vsel %vm316, %v578, 0
        %v592 = vsel %vm316, %v579, 0
        %594 = vmatpush.msra.mxu0 0.0
        %595 = vmatpush.msra.mxu0 0.0
        %596 = vmatpush.msra.mxu0 0.0
        %597 = vmatpush.msra.mxu0 0.0
        %598 = vmatpush.msra.mxu0 0.0
        %599 = vmatpush.msra.mxu0 0.0
        %600 = vmatpush.msra.mxu0 0.0
        %601 = vmatpush.msra.mxu0 0.0
        %602 = vmatpush.msra.mxu0 0.0
        %603 = vmatpush.msra.mxu0 0.0
        %604 = vmatpush.msra.mxu0 0.0
        %605 = vmatpush.msra.mxu0 0.0
        %606 = vmatpush.msra.mxu0 0.0
        %607 = vmatpush.msra.mxu0 0.0
        %608 = vmatpush.msra.mxu0 0.0
        %609 = vmatpush.msra.mxu0 %v586
        %610 = vmatmul.f32.gmra.mxu0 %v583
        %v611 = vpop.f32.mrf.mxu0
        %v612 = vadd.f32 0.0, %v611
        %613 = vdwg.mxu0
        %614 = vmatpush.msra.mxu0 0.0
        %615 = vmatpush.msra.mxu0 0.0
        %616 = vmatpush.msra.mxu0 0.0
        %617 = vmatpush.msra.mxu0 0.0
        %618 = vmatpush.msra.mxu0 0.0
        %619 = vmatpush.msra.mxu0 0.0
        %620 = vmatpush.msra.mxu0 0.0
        %621 = vmatpush.msra.mxu0 0.0
        %622 = vmatpush.msra.mxu0 0.0
        %623 = vmatpush.msra.mxu0 0.0
        %624 = vmatpush.msra.mxu0 0.0
        %625 = vmatpush.msra.mxu0 0.0
        %626 = vmatpush.msra.mxu0 0.0
        %627 = vmatpush.msra.mxu0 0.0
        %628 = vmatpush.msra.mxu0 0.0
        %629 = vmatpush.msra.mxu0 %v589
        %630 = vmatmul.f32.gmra.mxu0 %v583
        %v631 = vpop.f32.mrf.mxu0
        %v632 = vadd.f32 0.0, %v631
        %633 = vdwg.mxu0
        %634 = vmatpush.msra.mxu0 0.0
        %635 = vmatpush.msra.mxu0 0.0
        %636 = vmatpush.msra.mxu0 0.0
        %637 = vmatpush.msra.mxu0 0.0
        %638 = vmatpush.msra.mxu0 0.0
        %639 = vmatpush.msra.mxu0 0.0
        %640 = vmatpush.msra.mxu0 0.0
        %641 = vmatpush.msra.mxu0 0.0
        %642 = vmatpush.msra.mxu0 0.0
        %643 = vmatpush.msra.mxu0 0.0
        %644 = vmatpush.msra.mxu0 0.0
        %645 = vmatpush.msra.mxu0 0.0
        %646 = vmatpush.msra.mxu0 0.0
        %647 = vmatpush.msra.mxu0 0.0
        %648 = vmatpush.msra.mxu0 0.0
        %649 = vmatpush.msra.mxu0 %v592
        %650 = vmatmul.f32.gmra.mxu0 %v583
        %v651 = vpop.f32.mrf.mxu0
        %v652 = vadd.f32 0.0, %v651
        %653 = vdwg.mxu0
        %v654 = vadd.f32 %v556, %v612
        %v655 = vadd.f32 %v557, %v632
        %v656 = vadd.f32 %v558, %v652
        %s657 = scalar_lea.vmem %s1, 16
        %v658 = vld [vmem:[%s657] sm:$0xf]
        %659 = vst [vmem:[#allocation1] ss:$2 sm:$0xff] %v223
        %s660 = scalar_lea.vmem [#allocation1], 16
        %661 = vst [vmem:[%s660] ss:$2 sm:$0xff] %v224
        %v662 = vld.sshfl [vmem:[#allocation1] sm:$0xff pattern:$0x75316420]
        %v663 = vld.sshfl [vmem:[#allocation1 + $0x8] sm:$0xff pattern:$0x75316420]
        %v664 = vld.sshfl [vmem:[#allocation1 + $0x10] sm:$0xff pattern:$0x75316420]
        %665 = vrot.lane.b32.xlu0 %v662, 111
        %v666 = vpop.permute.xlu0 %665
        %667 = vrot.lane.b32.xlu0 %v663, 111
        %v668 = vpop.permute.xlu0 %667
        %669 = vrot.lane.b32.xlu0 %v664, 111
        %v670 = vpop.permute.xlu0 %669
        %vm671 = vcmask 908288
        %v672 = vsel %vm671, %v666, %v668
        %v673 = vsel %vm671, %v668, %v670
        %v675 = vsel %vm312, %v658, 0
        %v677 = vsel %vm316, %v672, 0
        %v679 = vsel %vm316, %v673, 0
        %v681 = vsel %vm316, %v670, 0
        %683 = vmatpush.msra.mxu0 0.0
        %684 = vmatpush.msra.mxu0 0.0
        %685 = vmatpush.msra.mxu0 0.0
        %686 = vmatpush.msra.mxu0 0.0
        %687 = vmatpush.msra.mxu0 0.0
        %688 = vmatpush.msra.mxu0 0.0
        %689 = vmatpush.msra.mxu0 0.0
        %690 = vmatpush.msra.mxu0 0.0
        %691 = vmatpush.msra.mxu0 0.0
        %692 = vmatpush.msra.mxu0 0.0
        %693 = vmatpush.msra.mxu0 0.0
        %694 = vmatpush.msra.mxu0 0.0
        %695 = vmatpush.msra.mxu0 0.0
        %696 = vmatpush.msra.mxu0 0.0
        %697 = vmatpush.msra.mxu0 0.0
        %698 = vmatpush.msra.mxu0 %v677
        %699 = vmatmul.f32.gmra.mxu0 %v675
        %v700 = vpop.f32.mrf.mxu0
        %v701 = vadd.f32 0.0, %v700
        %702 = vdwg.mxu0
        %703 = vmatpush.msra.mxu0 0.0
        %704 = vmatpush.msra.mxu0 0.0
        %705 = vmatpush.msra.mxu0 0.0
        %706 = vmatpush.msra.mxu0 0.0
        %707 = vmatpush.msra.mxu0 0.0
        %708 = vmatpush.msra.mxu0 0.0
        %709 = vmatpush.msra.mxu0 0.0
        %710 = vmatpush.msra.mxu0 0.0
        %711 = vmatpush.msra.mxu0 0.0
        %712 = vmatpush.msra.mxu0 0.0
        %713 = vmatpush.msra.mxu0 0.0
        %714 = vmatpush.msra.mxu0 0.0
        %715 = vmatpush.msra.mxu0 0.0
        %716 = vmatpush.msra.mxu0 0.0
        %717 = vmatpush.msra.mxu0 0.0
        %718 = vmatpush.msra.mxu0 %v679
        %719 = vmatmul.f32.gmra.mxu0 %v675
        %v720 = vpop.f32.mrf.mxu0
        %v721 = vadd.f32 0.0, %v720
        %722 = vdwg.mxu0
        %723 = vmatpush.msra.mxu0 0.0
        %724 = vmatpush.msra.mxu0 0.0
        %725 = vmatpush.msra.mxu0 0.0
        %726 = vmatpush.msra.mxu0 0.0
        %727 = vmatpush.msra.mxu0 0.0
        %728 = vmatpush.msra.mxu0 0.0
        %729 = vmatpush.msra.mxu0 0.0
        %730 = vmatpush.msra.mxu0 0.0
        %731 = vmatpush.msra.mxu0 0.0
        %732 = vmatpush.msra.mxu0 0.0
        %733 = vmatpush.msra.mxu0 0.0
        %734 = vmatpush.msra.mxu0 0.0
        %735 = vmatpush.msra.mxu0 0.0
        %736 = vmatpush.msra.mxu0 0.0
        %737 = vmatpush.msra.mxu0 0.0
        %738 = vmatpush.msra.mxu0 %v681
        %739 = vmatmul.f32.gmra.mxu0 %v675
        %v740 = vpop.f32.mrf.mxu0
        %v741 = vadd.f32 0.0, %v740
        %742 = vdwg.mxu0
        %v743 = vadd.f32 %v654, %v701
        %v744 = vadd.f32 %v655, %v721
        %v745 = vadd.f32 %v656, %v741
        %746 = vst [vmem:[#allocation1] ss:$2 sm:$0xff] %v223
        %s747 = scalar_lea.vmem [#allocation1], 16
        %748 = vst [vmem:[%s747] ss:$2 sm:$0xff] %v224
        %v749 = vld.sshfl [vmem:[#allocation1] sm:$0xff pattern:$0x75316420]
        %v750 = vld.sshfl [vmem:[#allocation1 + $0x8] sm:$0xff pattern:$0x75316420]
        %v751 = vld.sshfl [vmem:[#allocation1 + $0x10] sm:$0xff pattern:$0x75316420]
        %752 = vrot.lane.b32.xlu0 %v749, 110
        %v753 = vpop.permute.xlu0 %752
        %754 = vrot.lane.b32.xlu0 %v750, 110
        %v755 = vpop.permute.xlu0 %754
        %756 = vrot.lane.b32.xlu0 %v751, 110
        %v757 = vpop.permute.xlu0 %756
        %vm758 = vcmask 900096
        %v759 = vsel %vm758, %v753, %v755
        %v760 = vsel %vm758, %v755, %v757
        %v764 = vsel %vm458, %v759, 0.0
        %v765 = vsel %vm459, %v760, 0.0
        %v766 = vsel %vm460, %v757, 0.0
        %s767 = scalar_lea.vmem %s1, 20
        %v768 = vld [vmem:[%s767] sm:$0xf]
        %v770 = vsel %vm312, %v768, 0
        %v773 = vsel %vm316, %v764, 0
        %v776 = vsel %vm316, %v765, 0
        %v779 = vsel %vm316, %v766, 0
        %781 = vmatpush.msra.mxu0 0.0
        %782 = vmatpush.msra.mxu0 0.0
        %783 = vmatpush.msra.mxu0 0.0
        %784 = vmatpush.msra.mxu0 0.0
        %785 = vmatpush.msra.mxu0 0.0
        %786 = vmatpush.msra.mxu0 0.0
        %787 = vmatpush.msra.mxu0 0.0
        %788 = vmatpush.msra.mxu0 0.0
        %789 = vmatpush.msra.mxu0 0.0
        %790 = vmatpush.msra.mxu0 0.0
        %791 = vmatpush.msra.mxu0 0.0
        %792 = vmatpush.msra.mxu0 0.0
        %793 = vmatpush.msra.mxu0 0.0
        %794 = vmatpush.msra.mxu0 0.0
        %795 = vmatpush.msra.mxu0 0.0
        %796 = vmatpush.msra.mxu0 %v773
        %797 = vmatmul.f32.gmra.mxu0 %v770
        %v798 = vpop.f32.mrf.mxu0
        %v799 = vadd.f32 0.0, %v798
        %800 = vdwg.mxu0
        %801 = vmatpush.msra.mxu0 0.0
        %802 = vmatpush.msra.mxu0 0.0
        %803 = vmatpush.msra.mxu0 0.0
        %804 = vmatpush.msra.mxu0 0.0
        %805 = vmatpush.msra.mxu0 0.0
        %806 = vmatpush.msra.mxu0 0.0
        %807 = vmatpush.msra.mxu0 0.0
        %808 = vmatpush.msra.mxu0 0.0
        %809 = vmatpush.msra.mxu0 0.0
        %810 = vmatpush.msra.mxu0 0.0
        %811 = vmatpush.msra.mxu0 0.0
        %812 = vmatpush.msra.mxu0 0.0
        %813 = vmatpush.msra.mxu0 0.0
        %814 = vmatpush.msra.mxu0 0.0
        %815 = vmatpush.msra.mxu0 0.0
        %816 = vmatpush.msra.mxu0 %v776
        %817 = vmatmul.f32.gmra.mxu0 %v770
        %v818 = vpop.f32.mrf.mxu0
        %v819 = vadd.f32 0.0, %v818
        %820 = vdwg.mxu0
        %821 = vmatpush.msra.mxu0 0.0
        %822 = vmatpush.msra.mxu0 0.0
        %823 = vmatpush.msra.mxu0 0.0
        %824 = vmatpush.msra.mxu0 0.0
        %825 = vmatpush.msra.mxu0 0.0
        %826 = vmatpush.msra.mxu0 0.0
        %827 = vmatpush.msra.mxu0 0.0
        %828 = vmatpush.msra.mxu0 0.0
        %829 = vmatpush.msra.mxu0 0.0
        %830 = vmatpush.msra.mxu0 0.0
        %831 = vmatpush.msra.mxu0 0.0
        %832 = vmatpush.msra.mxu0 0.0
        %833 = vmatpush.msra.mxu0 0.0
        %834 = vmatpush.msra.mxu0 0.0
        %835 = vmatpush.msra.mxu0 0.0
        %836 = vmatpush.msra.mxu0 %v779
        %837 = vmatmul.f32.gmra.mxu0 %v770
        %v838 = vpop.f32.mrf.mxu0
        %v839 = vadd.f32 0.0, %v838
        %840 = vdwg.mxu0
        %v841 = vadd.f32 %v743, %v799
        %v842 = vadd.f32 %v744, %v819
        %v843 = vadd.f32 %v745, %v839
        %844 = vst [vmem:[#allocation1] ss:$2 sm:$0xff] %v223
        %s845 = scalar_lea.vmem [#allocation1], 16
        %846 = vst [vmem:[%s845] ss:$2 sm:$0xff] %v224
        %v847 = vld.sshfl [vmem:[#allocation1] sm:$0xff pattern:$0x75316420]
        %v848 = vld.sshfl [vmem:[#allocation1 + $0x8] sm:$0xff pattern:$0x75316420]
        %v849 = vld.sshfl [vmem:[#allocation1 + $0x10] sm:$0xff pattern:$0x75316420]
        %850 = vrot.lane.b32.xlu0 %v847, 96
        %v851 = vpop.permute.xlu0 %850
        %852 = vrot.lane.b32.xlu0 %v848, 96
        %v853 = vpop.permute.xlu0 %852
        %854 = vrot.lane.b32.xlu0 %v849, 96
        %v855 = vpop.permute.xlu0 %854
        %vm856 = vcmask 785408
        %v857 = vsel %vm856, %v851, %v853
        %v858 = vsel %vm856, %v853, %v855
        %v862 = vsel %vm277, %v857, 0.0
        %v863 = vsel %vm278, %v858, 0.0
        %v864 = vsel %vm279, %v855, 0.0
        %s865 = scalar_lea.vmem %s1, 24
        %v866 = vld [vmem:[%s865] sm:$0xf]
        %v868 = vsel %vm312, %v866, 0
        %v871 = vsel %vm316, %v862, 0
        %v874 = vsel %vm316, %v863, 0
        %v877 = vsel %vm316, %v864, 0
        %879 = vmatpush.msra.mxu0 0.0
        %880 = vmatpush.msra.mxu0 0.0
        %881 = vmatpush.msra.mxu0 0.0
        %882 = vmatpush.msra.mxu0 0.0
        %883 = vmatpush.msra.mxu0 0.0
        %884 = vmatpush.msra.mxu0 0.0
        %885 = vmatpush.msra.mxu0 0.0
        %886 = vmatpush.msra.mxu0 0.0
        %887 = vmatpush.msra.mxu0 0.0
        %888 = vmatpush.msra.mxu0 0.0
        %889 = vmatpush.msra.mxu0 0.0
        %890 = vmatpush.msra.mxu0 0.0
        %891 = vmatpush.msra.mxu0 0.0
        %892 = vmatpush.msra.mxu0 0.0
        %893 = vmatpush.msra.mxu0 0.0
        %894 = vmatpush.msra.mxu0 %v871
        %895 = vmatmul.f32.gmra.mxu0 %v868
        %v896 = vpop.f32.mrf.mxu0
        %v897 = vadd.f32 0.0, %v896
        %898 = vdwg.mxu0
        %899 = vmatpush.msra.mxu0 0.0
        %900 = vmatpush.msra.mxu0 0.0
        %901 = vmatpush.msra.mxu0 0.0
        %902 = vmatpush.msra.mxu0 0.0
        %903 = vmatpush.msra.mxu0 0.0
        %904 = vmatpush.msra.mxu0 0.0
        %905 = vmatpush.msra.mxu0 0.0
        %906 = vmatpush.msra.mxu0 0.0
        %907 = vmatpush.msra.mxu0 0.0
        %908 = vmatpush.msra.mxu0 0.0
        %909 = vmatpush.msra.mxu0 0.0
        %910 = vmatpush.msra.mxu0 0.0
        %911 = vmatpush.msra.mxu0 0.0
        %912 = vmatpush.msra.mxu0 0.0
        %913 = vmatpush.msra.mxu0 0.0
        %914 = vmatpush.msra.mxu0 %v874
        %915 = vmatmul.f32.gmra.mxu0 %v868
        %v916 = vpop.f32.mrf.mxu0
        %v917 = vadd.f32 0.0, %v916
        %918 = vdwg.mxu0
        %919 = vmatpush.msra.mxu0 0.0
        %920 = vmatpush.msra.mxu0 0.0
        %921 = vmatpush.msra.mxu0 0.0
        %922 = vmatpush.msra.mxu0 0.0
        %923 = vmatpush.msra.mxu0 0.0
        %924 = vmatpush.msra.mxu0 0.0
        %925 = vmatpush.msra.mxu0 0.0
        %926 = vmatpush.msra.mxu0 0.0
        %927 = vmatpush.msra.mxu0 0.0
        %928 = vmatpush.msra.mxu0 0.0
        %929 = vmatpush.msra.mxu0 0.0
        %930 = vmatpush.msra.mxu0 0.0
        %931 = vmatpush.msra.mxu0 0.0
        %932 = vmatpush.msra.mxu0 0.0
        %933 = vmatpush.msra.mxu0 0.0
        %934 = vmatpush.msra.mxu0 %v877
        %935 = vmatmul.f32.gmra.mxu0 %v868
        %v936 = vpop.f32.mrf.mxu0
        %v937 = vadd.f32 0.0, %v936
        %938 = vdwg.mxu0
        %v939 = vadd.f32 %v841, %v897
        %v940 = vadd.f32 %v842, %v917
        %v941 = vadd.f32 %v843, %v937
        %s942 = scalar_lea.vmem %s1, 28
        %v943 = vld [vmem:[%s942] sm:$0xf]
        %944 = vst [vmem:[#allocation1] ss:$2 sm:$0xff] %v223
        %s945 = scalar_lea.vmem [#allocation1], 16
        %946 = vst [vmem:[%s945] ss:$2 sm:$0xff] %v224
        %v947 = vld.sshfl [vmem:[#allocation1] sm:$0xff pattern:$0x75316420]
        %v948 = vld.sshfl [vmem:[#allocation1 + $0x8] sm:$0xff pattern:$0x75316420]
        %v949 = vld.sshfl [vmem:[#allocation1 + $0x10] sm:$0xff pattern:$0x75316420]
        %950 = vrot.lane.b32.xlu0 %v947, 95
        %v951 = vpop.permute.xlu0 %950
        %952 = vrot.lane.b32.xlu0 %v948, 95
        %v953 = vpop.permute.xlu0 %952
        %954 = vrot.lane.b32.xlu0 %v949, 95
        %v955 = vpop.permute.xlu0 %954
        %vm956 = vcmask 777216
        %v957 = vsel %vm956, %v951, %v953
        %v958 = vsel %vm956, %v953, %v955
        %v960 = vsel %vm312, %v943, 0
        %v962 = vsel %vm316, %v957, 0
        %v964 = vsel %vm316, %v958, 0
        %v966 = vsel %vm316, %v955, 0
        %968 = vmatpush.msra.mxu0 0.0
        %969 = vmatpush.msra.mxu0 0.0
        %970 = vmatpush.msra.mxu0 0.0
        %971 = vmatpush.msra.mxu0 0.0
        %972 = vmatpush.msra.mxu0 0.0
        %973 = vmatpush.msra.mxu0 0.0
        %974 = vmatpush.msra.mxu0 0.0
        %975 = vmatpush.msra.mxu0 0.0
        %976 = vmatpush.msra.mxu0 0.0
        %977 = vmatpush.msra.mxu0 0.0
        %978 = vmatpush.msra.mxu0 0.0
        %979 = vmatpush.msra.mxu0 0.0
        %980 = vmatpush.msra.mxu0 0.0
        %981 = vmatpush.msra.mxu0 0.0
        %982 = vmatpush.msra.mxu0 0.0
        %983 = vmatpush.msra.mxu0 %v962
        %984 = vmatmul.f32.gmra.mxu0 %v960
        %v985 = vpop.f32.mrf.mxu0
        %v986 = vadd.f32 0.0, %v985
        %987 = vdwg.mxu0
        %988 = vmatpush.msra.mxu0 0.0
        %989 = vmatpush.msra.mxu0 0.0
        %990 = vmatpush.msra.mxu0 0.0
        %991 = vmatpush.msra.mxu0 0.0
        %992 = vmatpush.msra.mxu0 0.0
        %993 = vmatpush.msra.mxu0 0.0
        %994 = vmatpush.msra.mxu0 0.0
        %995 = vmatpush.msra.mxu0 0.0
        %996 = vmatpush.msra.mxu0 0.0
        %997 = vmatpush.msra.mxu0 0.0
        %998 = vmatpush.msra.mxu0 0.0
        %999 = vmatpush.msra.mxu0 0.0
        %1000 = vmatpush.msra.mxu0 0.0
        %1001 = vmatpush.msra.mxu0 0.0
        %1002 = vmatpush.msra.mxu0 0.0
        %1003 = vmatpush.msra.mxu0 %v964
        %1004 = vmatmul.f32.gmra.mxu0 %v960
        %v1005 = vpop.f32.mrf.mxu0
        %v1006 = vadd.f32 0.0, %v1005
        %1007 = vdwg.mxu0
        %1008 = vmatpush.msra.mxu0 0.0
        %1009 = vmatpush.msra.mxu0 0.0
        %1010 = vmatpush.msra.mxu0 0.0
        %1011 = vmatpush.msra.mxu0 0.0
        %1012 = vmatpush.msra.mxu0 0.0
        %1013 = vmatpush.msra.mxu0 0.0
        %1014 = vmatpush.msra.mxu0 0.0
        %1015 = vmatpush.msra.mxu0 0.0
        %1016 = vmatpush.msra.mxu0 0.0
        %1017 = vmatpush.msra.mxu0 0.0
        %1018 = vmatpush.msra.mxu0 0.0
        %1019 = vmatpush.msra.mxu0 0.0
        %1020 = vmatpush.msra.mxu0 0.0
        %1021 = vmatpush.msra.mxu0 0.0
        %1022 = vmatpush.msra.mxu0 0.0
        %1023 = vmatpush.msra.mxu0 %v966
        %1024 = vmatmul.f32.gmra.mxu0 %v960
        %v1025 = vpop.f32.mrf.mxu0
        %v1026 = vadd.f32 0.0, %v1025
        %1027 = vdwg.mxu0
        %v1028 = vadd.f32 %v939, %v986
        %v1029 = vadd.f32 %v940, %v1006
        %v1030 = vadd.f32 %v941, %v1026
        %1031 = vst [vmem:[#allocation1] ss:$2 sm:$0xff] %v223
        %s1032 = scalar_lea.vmem [#allocation1], 16
        %1033 = vst [vmem:[%s1032] ss:$2 sm:$0xff] %v224
        %v1034 = vld.sshfl [vmem:[#allocation1] sm:$0xff pattern:$0x75316420]
        %v1035 = vld.sshfl [vmem:[#allocation1 + $0x8] sm:$0xff pattern:$0x75316420]
        %v1036 = vld.sshfl [vmem:[#allocation1 + $0x10] sm:$0xff pattern:$0x75316420]
        %1037 = vrot.lane.b32.xlu0 %v1034, 94
        %v1038 = vpop.permute.xlu0 %1037
        %1039 = vrot.lane.b32.xlu0 %v1035, 94
        %v1040 = vpop.permute.xlu0 %1039
        %1041 = vrot.lane.b32.xlu0 %v1036, 94
        %v1042 = vpop.permute.xlu0 %1041
        %vm1043 = vcmask 769024
        %v1044 = vsel %vm1043, %v1038, %v1040
        %v1045 = vsel %vm1043, %v1040, %v1042
        %v1049 = vsel %vm458, %v1044, 0.0
        %v1050 = vsel %vm459, %v1045, 0.0
        %v1051 = vsel %vm460, %v1042, 0.0
        %s1052 = scalar_lea.vmem %s1, 32
        %v1053 = vld [vmem:[%s1052] sm:$0xf]
        %v1055 = vsel %vm312, %v1053, 0
        %v1058 = vsel %vm316, %v1049, 0
        %v1061 = vsel %vm316, %v1050, 0
        %v1064 = vsel %vm316, %v1051, 0
        %1066 = vmatpush.msra.mxu0 0.0
        %1067 = vmatpush.msra.mxu0 0.0
        %1068 = vmatpush.msra.mxu0 0.0
        %1069 = vmatpush.msra.mxu0 0.0
        %1070 = vmatpush.msra.mxu0 0.0
        %1071 = vmatpush.msra.mxu0 0.0
        %1072 = vmatpush.msra.mxu0 0.0
        %1073 = vmatpush.msra.mxu0 0.0
        %1074 = vmatpush.msra.mxu0 0.0
        %1075 = vmatpush.msra.mxu0 0.0
        %1076 = vmatpush.msra.mxu0 0.0
        %1077 = vmatpush.msra.mxu0 0.0
        %1078 = vmatpush.msra.mxu0 0.0
        %1079 = vmatpush.msra.mxu0 0.0
        %1080 = vmatpush.msra.mxu0 0.0
        %1081 = vmatpush.msra.mxu0 %v1058
        %1082 = vmatmul.f32.gmra.mxu0 %v1055
        %v1083 = vpop.f32.mrf.mxu0
        %v1084 = vadd.f32 0.0, %v1083
        %1085 = vdwg.mxu0
        %1086 = vmatpush.msra.mxu0 0.0
        %1087 = vmatpush.msra.mxu0 0.0
        %1088 = vmatpush.msra.mxu0 0.0
        %1089 = vmatpush.msra.mxu0 0.0
        %1090 = vmatpush.msra.mxu0 0.0
        %1091 = vmatpush.msra.mxu0 0.0
        %1092 = vmatpush.msra.mxu0 0.0
        %1093 = vmatpush.msra.mxu0 0.0
        %1094 = vmatpush.msra.mxu0 0.0
        %1095 = vmatpush.msra.mxu0 0.0
        %1096 = vmatpush.msra.mxu0 0.0
        %1097 = vmatpush.msra.mxu0 0.0
        %1098 = vmatpush.msra.mxu0 0.0
        %1099 = vmatpush.msra.mxu0 0.0
        %1100 = vmatpush.msra.mxu0 0.0
        %1101 = vmatpush.msra.mxu0 %v1061
        %1102 = vmatmul.f32.gmra.mxu0 %v1055
        %v1103 = vpop.f32.mrf.mxu0
        %v1104 = vadd.f32 0.0, %v1103
        %1105 = vdwg.mxu0
        %1106 = vmatpush.msra.mxu0 0.0
        %1107 = vmatpush.msra.mxu0 0.0
        %1108 = vmatpush.msra.mxu0 0.0
        %1109 = vmatpush.msra.mxu0 0.0
        %1110 = vmatpush.msra.mxu0 0.0
        %1111 = vmatpush.msra.mxu0 0.0
        %1112 = vmatpush.msra.mxu0 0.0
        %1113 = vmatpush.msra.mxu0 0.0
        %1114 = vmatpush.msra.mxu0 0.0
        %1115 = vmatpush.msra.mxu0 0.0
        %1116 = vmatpush.msra.mxu0 0.0
        %1117 = vmatpush.msra.mxu0 0.0
        %1118 = vmatpush.msra.mxu0 0.0
        %1119 = vmatpush.msra.mxu0 0.0
        %1120 = vmatpush.msra.mxu0 0.0
        %1121 = vmatpush.msra.mxu0 %v1064
        %1122 = vmatmul.f32.gmra.mxu0 %v1055
        %v1123 = vpop.f32.mrf.mxu0
        %v1124 = vadd.f32 0.0, %v1123
        %1125 = vdwg.mxu0
        %v1126 = vadd.f32 %v1028, %v1084
        %v1127 = vadd.f32 %v1029, %v1104
        %v1128 = vadd.f32 %v1030, %v1124
        %v1129 = vld [vmem:[%s2] sm:$0xf]
        %1131 = vset.pattern.permute.xlu0 0
        %1132 = vperm.xlu0 %1131, %v1129
        %v1133 = vpop.permute.xlu0 %1132
        %v1135 = vadd.f32 %v1126, %v1133
        %v1136 = vadd.f32 %v1127, %v1133
        %v1137 = vadd.f32 %v1128, %v1133
        %v1138 = vmax.f32 %v1135, 0.0
        %v1139 = vmax.f32 %v1136, 0.0
        %v1140 = vmax.f32 %v1137, 0.0
        %vm1141 = vcmp.ge.s32.totalorder %v226, 17
        %vm1142 = vcmp.ge.s32.totalorder %v227, 17
        %vm1143 = vcmp.ge.s32.totalorder %v228, 17
        %vm1144 = vcmp.lt.s32.totalorder %v226, 273
        %vm1145 = vcmp.lt.s32.totalorder %v227, 273
        %vm1146 = vcmp.lt.s32.totalorder %v228, 273
        %vm1147 = vmand %vm1141, %vm1144
        %vm1148 = vmand %vm1142, %vm1145
        %vm1149 = vmand %vm1143, %vm1146
        %v1150 = vsel %vm1147, 1, 0
        %v1151 = vsel %vm1148, 1, 0
        %v1152 = vsel %vm1149, 1, 0
        %vm1153 = vcmp.eq.s32.totalorder %v1150, 1
        %vm1154 = vcmp.eq.s32.totalorder %v1151, 1
        %vm1155 = vcmp.eq.s32.totalorder %v1152, 1
        %v1156 = vsel %vm1153, %v1138, 0.0
        %v1157 = vsel %vm1154, %v1139, 0.0
        %v1158 = vsel %vm1155, %v1140, 0.0
        %vm1159 = vcmp.lt.s32.totalorder %v226, 0
        %v1160 = vsub.s32 0, %v226
        %v1161 = vsel %vm1159, %v1160, %v226
        %v1162 = vshrl.u32 %v1161, 4
        %v1163 = vand.u32 %v1161, 15
        %v1164 = vsub.s32 0, %v1163
        %v1165 = vsel %vm1159, %v1164, %v1163
        %vm1166 = vcmp.lt.s32.totalorder %v227, 0
        %v1167 = vsub.s32 0, %v227
        %v1168 = vsel %vm1166, %v1167, %v227
        %v1169 = vshrl.u32 %v1168, 4
        %v1170 = vand.u32 %v1168, 15
        %v1171 = vsub.s32 0, %v1170
        %v1172 = vsel %vm1166, %v1171, %v1170
        %vm1173 = vcmp.ne.s32.totalorder %v1165, 0
        %vm1174 = vcmp.ne.s32.totalorder %v1172, 0
        %vm1175 = vcmp.lt.s32.totalorder %v1165, 0
        %vm1176 = vcmp.lt.s32.totalorder %v1172, 0
        %vm1177 = vmand %vm1175, %vm1173
        %vm1178 = vmand %vm1176, %vm1174
        %v1179 = vadd.s32 %v1165, 16
        %v1180 = vadd.s32 %v1172, 16
        %v1181 = vsel %vm1177, %v1179, %v1165
        %v1182 = vsel %vm1178, %v1180, %v1172
        %vm1183 = vcmp.ge.s32.totalorder %v1181, 1
        %vm1184 = vcmp.ge.s32.totalorder %v1182, 1
        %vm1185 = vcmp.le.s32.totalorder %v1181, 14
        %vm1186 = vcmp.le.s32.totalorder %v1182, 14
        %v1187 = vsel %vm1183, 1, 0
        %v1188 = vsel %vm1184, 1, 0
        %vm1189 = vcmp.eq.s32.totalorder %v1187, 1
        %vm1190 = vcmp.eq.s32.totalorder %v1188, 1
        %v1191 = vsel %vm1189, %v1156, 0.0
        %v1192 = vsel %vm1190, %v1157, 0.0
        %v1193 = vld [vmem:[%s3] sm:$0xf]
        %s1194 = scalar_lea.vmem %s3, 4
        %v1195 = vld [vmem:[%s1194] sm:$0xf]
        %1199 = vrot.lane.b32.xlu0 %v1156, 127
        %v1200 = vpop.permute.xlu0 %1199
        %1201 = vrot.lane.b32.xlu0 %v1157, 127
        %v1202 = vpop.permute.xlu0 %1201
        %1203 = vrot.lane.b32.xlu0 %v1158, 127
        %v1204 = vpop.permute.xlu0 %1203
        %v1205 = vsel %vm309, %v1200, %v1202
        %v1206 = vsel %vm309, %v1202, %v1204
        %v1208 = vsel %vm312, %v1195, 0
        %v1210 = vsel %vm316, %v1205, 0
        %v1212 = vsel %vm316, %v1206, 0
        %1214 = vmatpush.msra.mxu0 0.0
        %1215 = vmatpush.msra.mxu0 0.0
        %1216 = vmatpush.msra.mxu0 0.0
        %1217 = vmatpush.msra.mxu0 0.0
        %1218 = vmatpush.msra.mxu0 0.0
        %1219 = vmatpush.msra.mxu0 0.0
        %1220 = vmatpush.msra.mxu0 0.0
        %1221 = vmatpush.msra.mxu0 0.0
        %1222 = vmatpush.msra.mxu0 0.0
        %1223 = vmatpush.msra.mxu0 0.0
        %1224 = vmatpush.msra.mxu0 0.0
        %1225 = vmatpush.msra.mxu0 0.0
        %1226 = vmatpush.msra.mxu0 0.0
        %1227 = vmatpush.msra.mxu0 0.0
        %1228 = vmatpush.msra.mxu0 0.0
        %1229 = vmatpush.msra.mxu0 %v1210
        %1230 = vmatmul.f32.gmra.mxu0 %v1208
        %v1231 = vpop.f32.mrf.mxu0
        %v1232 = vadd.f32 0.0, %v1231
        %1233 = vdwg.mxu0
        %1234 = vmatpush.msra.mxu0 0.0
        %1235 = vmatpush.msra.mxu0 0.0
        %1236 = vmatpush.msra.mxu0 0.0
        %1237 = vmatpush.msra.mxu0 0.0
        %1238 = vmatpush.msra.mxu0 0.0
        %1239 = vmatpush.msra.mxu0 0.0
        %1240 = vmatpush.msra.mxu0 0.0
        %1241 = vmatpush.msra.mxu0 0.0
        %1242 = vmatpush.msra.mxu0 0.0
        %1243 = vmatpush.msra.mxu0 0.0
        %1244 = vmatpush.msra.mxu0 0.0
        %1245 = vmatpush.msra.mxu0 0.0
        %1246 = vmatpush.msra.mxu0 0.0
        %1247 = vmatpush.msra.mxu0 0.0
        %1248 = vmatpush.msra.mxu0 0.0
        %1249 = vmatpush.msra.mxu0 %v1212
        %1250 = vmatmul.f32.gmra.mxu0 %v1208
        %v1251 = vpop.f32.mrf.mxu0
        %v1252 = vadd.f32 0.0, %v1251
        %1253 = vdwg.mxu0
        %v1255 = vsel %vm312, %v1193, 0
        %v1258 = vsel %vm316, %v1191, 0
        %v1261 = vsel %vm316, %v1192, 0
        %1263 = vmatpush.msra.mxu0 0.0
        %1264 = vmatpush.msra.mxu0 0.0
        %1265 = vmatpush.msra.mxu0 0.0
        %1266 = vmatpush.msra.mxu0 0.0
        %1267 = vmatpush.msra.mxu0 0.0
        %1268 = vmatpush.msra.mxu0 0.0
        %1269 = vmatpush.msra.mxu0 0.0
        %1270 = vmatpush.msra.mxu0 0.0
        %1271 = vmatpush.msra.mxu0 0.0
        %1272 = vmatpush.msra.mxu0 0.0
        %1273 = vmatpush.msra.mxu0 0.0
        %1274 = vmatpush.msra.mxu0 0.0
        %1275 = vmatpush.msra.mxu0 0.0
        %1276 = vmatpush.msra.mxu0 0.0
        %1277 = vmatpush.msra.mxu0 0.0
        %1278 = vmatpush.msra.mxu0 %v1258
        %1279 = vmatmul.f32.gmra.mxu0 %v1255
        %v1280 = vpop.f32.mrf.mxu0
        %v1281 = vadd.f32 %v1232, %v1280
        %1282 = vdwg.mxu0
        %1283 = vmatpush.msra.mxu0 0.0
        %1284 = vmatpush.msra.mxu0 0.0
        %1285 = vmatpush.msra.mxu0 0.0
        %1286 = vmatpush.msra.mxu0 0.0
        %1287 = vmatpush.msra.mxu0 0.0
        %1288 = vmatpush.msra.mxu0 0.0
        %1289 = vmatpush.msra.mxu0 0.0
        %1290 = vmatpush.msra.mxu0 0.0
        %1291 = vmatpush.msra.mxu0 0.0
        %1292 = vmatpush.msra.mxu0 0.0
        %1293 = vmatpush.msra.mxu0 0.0
        %1294 = vmatpush.msra.mxu0 0.0
        %1295 = vmatpush.msra.mxu0 0.0
        %1296 = vmatpush.msra.mxu0 0.0
        %1297 = vmatpush.msra.mxu0 0.0
        %1298 = vmatpush.msra.mxu0 %v1261
        %1299 = vmatmul.f32.gmra.mxu0 %v1255
        %v1300 = vpop.f32.mrf.mxu0
        %v1301 = vadd.f32 %v1252, %v1300
        %1302 = vdwg.mxu0
        %v1303 = vsel %vm1185, 1, 0
        %v1304 = vsel %vm1186, 1, 0
        %vm1305 = vcmp.eq.s32.totalorder %v1303, 1
        %vm1306 = vcmp.eq.s32.totalorder %v1304, 1
        %1307 = vrot.lane.b32.xlu0 %v1156, 126
        %v1308 = vpop.permute.xlu0 %1307
        %1309 = vrot.lane.b32.xlu0 %v1157, 126
        %v1310 = vpop.permute.xlu0 %1309
        %1311 = vrot.lane.b32.xlu0 %v1158, 126
        %v1312 = vpop.permute.xlu0 %1311
        %v1313 = vsel %vm473, %v1308, %v1310
        %v1314 = vsel %vm473, %v1310, %v1312
        %v1317 = vsel %vm1305, %v1313, 0.0
        %v1318 = vsel %vm1306, %v1314, 0.0
        %s1319 = scalar_lea.vmem %s3, 8
        %v1320 = vld [vmem:[%s1319] sm:$0xf]
        %v1322 = vsel %vm312, %v1320, 0
        %v1325 = vsel %vm316, %v1317, 0
        %v1328 = vsel %vm316, %v1318, 0
        %1330 = vmatpush.msra.mxu0 0.0
        %1331 = vmatpush.msra.mxu0 0.0
        %1332 = vmatpush.msra.mxu0 0.0
        %1333 = vmatpush.msra.mxu0 0.0
        %1334 = vmatpush.msra.mxu0 0.0
        %1335 = vmatpush.msra.mxu0 0.0
        %1336 = vmatpush.msra.mxu0 0.0
        %1337 = vmatpush.msra.mxu0 0.0
        %1338 = vmatpush.msra.mxu0 0.0
        %1339 = vmatpush.msra.mxu0 0.0
        %1340 = vmatpush.msra.mxu0 0.0
        %1341 = vmatpush.msra.mxu0 0.0
        %1342 = vmatpush.msra.mxu0 0.0
        %1343 = vmatpush.msra.mxu0 0.0
        %1344 = vmatpush.msra.mxu0 0.0
        %1345 = vmatpush.msra.mxu0 %v1325
        %1346 = vmatmul.f32.gmra.mxu0 %v1322
        %v1347 = vpop.f32.mrf.mxu0
        %v1348 = vadd.f32 0.0, %v1347
        %1349 = vdwg.mxu0
        %1350 = vmatpush.msra.mxu0 0.0
        %1351 = vmatpush.msra.mxu0 0.0
        %1352 = vmatpush.msra.mxu0 0.0
        %1353 = vmatpush.msra.mxu0 0.0
        %1354 = vmatpush.msra.mxu0 0.0
        %1355 = vmatpush.msra.mxu0 0.0
        %1356 = vmatpush.msra.mxu0 0.0
        %1357 = vmatpush.msra.mxu0 0.0
        %1358 = vmatpush.msra.mxu0 0.0
        %1359 = vmatpush.msra.mxu0 0.0
        %1360 = vmatpush.msra.mxu0 0.0
        %1361 = vmatpush.msra.mxu0 0.0
        %1362 = vmatpush.msra.mxu0 0.0
        %1363 = vmatpush.msra.mxu0 0.0
        %1364 = vmatpush.msra.mxu0 0.0
        %1365 = vmatpush.msra.mxu0 %v1328
        %1366 = vmatmul.f32.gmra.mxu0 %v1322
        %v1367 = vpop.f32.mrf.mxu0
        %v1368 = vadd.f32 0.0, %v1367
        %1369 = vdwg.mxu0
        %v1370 = vadd.f32 %v1281, %v1348
        %v1371 = vadd.f32 %v1301, %v1368
        %1372 = vrot.lane.b32.xlu0 %v1156, 112
        %v1373 = vpop.permute.xlu0 %1372
        %1374 = vrot.lane.b32.xlu0 %v1157, 112
        %v1375 = vpop.permute.xlu0 %1374
        %1376 = vrot.lane.b32.xlu0 %v1158, 112
        %v1377 = vpop.permute.xlu0 %1376
        %v1378 = vsel %vm571, %v1373, %v1375
        %v1379 = vsel %vm571, %v1375, %v1377
        %v1382 = vsel %vm1189, %v1378, 0.0
        %v1383 = vsel %vm1190, %v1379, 0.0
        %s1384 = scalar_lea.vmem %s3, 12
        %v1385 = vld [vmem:[%s1384] sm:$0xf]
        %v1387 = vsel %vm312, %v1385, 0
        %v1390 = vsel %vm316, %v1382, 0
        %v1393 = vsel %vm316, %v1383, 0
        %1395 = vmatpush.msra.mxu0 0.0
        %1396 = vmatpush.msra.mxu0 0.0
        %1397 = vmatpush.msra.mxu0 0.0
        %1398 = vmatpush.msra.mxu0 0.0
        %1399 = vmatpush.msra.mxu0 0.0
        %1400 = vmatpush.msra.mxu0 0.0
        %1401 = vmatpush.msra.mxu0 0.0
        %1402 = vmatpush.msra.mxu0 0.0
        %1403 = vmatpush.msra.mxu0 0.0
        %1404 = vmatpush.msra.mxu0 0.0
        %1405 = vmatpush.msra.mxu0 0.0
        %1406 = vmatpush.msra.mxu0 0.0
        %1407 = vmatpush.msra.mxu0 0.0
        %1408 = vmatpush.msra.mxu0 0.0
        %1409 = vmatpush.msra.mxu0 0.0
        %1410 = vmatpush.msra.mxu0 %v1390
        %1411 = vmatmul.f32.gmra.mxu0 %v1387
        %v1412 = vpop.f32.mrf.mxu0
        %v1413 = vadd.f32 0.0, %v1412
        %1414 = vdwg.mxu0
        %1415 = vmatpush.msra.mxu0 0.0
        %1416 = vmatpush.msra.mxu0 0.0
        %1417 = vmatpush.msra.mxu0 0.0
        %1418 = vmatpush.msra.mxu0 0.0
        %1419 = vmatpush.msra.mxu0 0.0
        %1420 = vmatpush.msra.mxu0 0.0
        %1421 = vmatpush.msra.mxu0 0.0
        %1422 = vmatpush.msra.mxu0 0.0
        %1423 = vmatpush.msra.mxu0 0.0
        %1424 = vmatpush.msra.mxu0 0.0
        %1425 = vmatpush.msra.mxu0 0.0
        %1426 = vmatpush.msra.mxu0 0.0
        %1427 = vmatpush.msra.mxu0 0.0
        %1428 = vmatpush.msra.mxu0 0.0
        %1429 = vmatpush.msra.mxu0 0.0
        %1430 = vmatpush.msra.mxu0 %v1393
        %1431 = vmatmul.f32.gmra.mxu0 %v1387
        %v1432 = vpop.f32.mrf.mxu0
        %v1433 = vadd.f32 0.0, %v1432
        %1434 = vdwg.mxu0
        %v1435 = vadd.f32 %v1370, %v1413
        %v1436 = vadd.f32 %v1371, %v1433
        %s1437 = scalar_lea.vmem %s3, 16
        %v1438 = vld [vmem:[%s1437] sm:$0xf]
        %1439 = vrot.lane.b32.xlu0 %v1156, 111
        %v1440 = vpop.permute.xlu0 %1439
        %1441 = vrot.lane.b32.xlu0 %v1157, 111
        %v1442 = vpop.permute.xlu0 %1441
        %1443 = vrot.lane.b32.xlu0 %v1158, 111
        %v1444 = vpop.permute.xlu0 %1443
        %v1445 = vsel %vm671, %v1440, %v1442
        %v1446 = vsel %vm671, %v1442, %v1444
        %v1448 = vsel %vm312, %v1438, 0
        %v1450 = vsel %vm316, %v1445, 0
        %v1452 = vsel %vm316, %v1446, 0
        %1454 = vmatpush.msra.mxu0 0.0
        %1455 = vmatpush.msra.mxu0 0.0
        %1456 = vmatpush.msra.mxu0 0.0
        %1457 = vmatpush.msra.mxu0 0.0
        %1458 = vmatpush.msra.mxu0 0.0
        %1459 = vmatpush.msra.mxu0 0.0
        %1460 = vmatpush.msra.mxu0 0.0
        %1461 = vmatpush.msra.mxu0 0.0
        %1462 = vmatpush.msra.mxu0 0.0
        %1463 = vmatpush.msra.mxu0 0.0
        %1464 = vmatpush.msra.mxu0 0.0
        %1465 = vmatpush.msra.mxu0 0.0
        %1466 = vmatpush.msra.mxu0 0.0
        %1467 = vmatpush.msra.mxu0 0.0
        %1468 = vmatpush.msra.mxu0 0.0
        %1469 = vmatpush.msra.mxu0 %v1450
        %1470 = vmatmul.f32.gmra.mxu0 %v1448
        %v1471 = vpop.f32.mrf.mxu0
        %v1472 = vadd.f32 0.0, %v1471
        %1473 = vdwg.mxu0
        %1474 = vmatpush.msra.mxu0 0.0
        %1475 = vmatpush.msra.mxu0 0.0
        %1476 = vmatpush.msra.mxu0 0.0
        %1477 = vmatpush.msra.mxu0 0.0
        %1478 = vmatpush.msra.mxu0 0.0
        %1479 = vmatpush.msra.mxu0 0.0
        %1480 = vmatpush.msra.mxu0 0.0
        %1481 = vmatpush.msra.mxu0 0.0
        %1482 = vmatpush.msra.mxu0 0.0
        %1483 = vmatpush.msra.mxu0 0.0
        %1484 = vmatpush.msra.mxu0 0.0
        %1485 = vmatpush.msra.mxu0 0.0
        %1486 = vmatpush.msra.mxu0 0.0
        %1487 = vmatpush.msra.mxu0 0.0
        %1488 = vmatpush.msra.mxu0 0.0
        %1489 = vmatpush.msra.mxu0 %v1452
        %1490 = vmatmul.f32.gmra.mxu0 %v1448
        %v1491 = vpop.f32.mrf.mxu0
        %v1492 = vadd.f32 0.0, %v1491
        %1493 = vdwg.mxu0
        %v1494 = vadd.f32 %v1435, %v1472
        %v1495 = vadd.f32 %v1436, %v1492
        %1496 = vrot.lane.b32.xlu0 %v1156, 110
        %v1497 = vpop.permute.xlu0 %1496
        %1498 = vrot.lane.b32.xlu0 %v1157, 110
        %v1499 = vpop.permute.xlu0 %1498
        %1500 = vrot.lane.b32.xlu0 %v1158, 110
        %v1501 = vpop.permute.xlu0 %1500
        %v1502 = vsel %vm758, %v1497, %v1499
        %v1503 = vsel %vm758, %v1499, %v1501
        %v1506 = vsel %vm1305, %v1502, 0.0
        %v1507 = vsel %vm1306, %v1503, 0.0
        %s1508 = scalar_lea.vmem %s3, 20
        %v1509 = vld [vmem:[%s1508] sm:$0xf]
        %v1511 = vsel %vm312, %v1509, 0
        %v1514 = vsel %vm316, %v1506, 0
        %v1517 = vsel %vm316, %v1507, 0
        %1519 = vmatpush.msra.mxu0 0.0
        %1520 = vmatpush.msra.mxu0 0.0
        %1521 = vmatpush.msra.mxu0 0.0
        %1522 = vmatpush.msra.mxu0 0.0
        %1523 = vmatpush.msra.mxu0 0.0
        %1524 = vmatpush.msra.mxu0 0.0
        %1525 = vmatpush.msra.mxu0 0.0
        %1526 = vmatpush.msra.mxu0 0.0
        %1527 = vmatpush.msra.mxu0 0.0
        %1528 = vmatpush.msra.mxu0 0.0
        %1529 = vmatpush.msra.mxu0 0.0
        %1530 = vmatpush.msra.mxu0 0.0
        %1531 = vmatpush.msra.mxu0 0.0
        %1532 = vmatpush.msra.mxu0 0.0
        %1533 = vmatpush.msra.mxu0 0.0
        %1534 = vmatpush.msra.mxu0 %v1514
        %1535 = vmatmul.f32.gmra.mxu0 %v1511
        %v1536 = vpop.f32.mrf.mxu0
        %v1537 = vadd.f32 0.0, %v1536
        %1538 = vdwg.mxu0
        %1539 = vmatpush.msra.mxu0 0.0
        %1540 = vmatpush.msra.mxu0 0.0
        %1541 = vmatpush.msra.mxu0 0.0
        %1542 = vmatpush.msra.mxu0 0.0
        %1543 = vmatpush.msra.mxu0 0.0
        %1544 = vmatpush.msra.mxu0 0.0
        %1545 = vmatpush.msra.mxu0 0.0
        %1546 = vmatpush.msra.mxu0 0.0
        %1547 = vmatpush.msra.mxu0 0.0
        %1548 = vmatpush.msra.mxu0 0.0
        %1549 = vmatpush.msra.mxu0 0.0
        %1550 = vmatpush.msra.mxu0 0.0
        %1551 = vmatpush.msra.mxu0 0.0
        %1552 = vmatpush.msra.mxu0 0.0
        %1553 = vmatpush.msra.mxu0 0.0
        %1554 = vmatpush.msra.mxu0 %v1517
        %1555 = vmatmul.f32.gmra.mxu0 %v1511
        %v1556 = vpop.f32.mrf.mxu0
        %v1557 = vadd.f32 0.0, %v1556
        %1558 = vdwg.mxu0
        %v1559 = vadd.f32 %v1494, %v1537
        %v1560 = vadd.f32 %v1495, %v1557
        %1561 = vrot.lane.b32.xlu0 %v1156, 96
        %v1562 = vpop.permute.xlu0 %1561
        %1563 = vrot.lane.b32.xlu0 %v1157, 96
        %v1564 = vpop.permute.xlu0 %1563
        %1565 = vrot.lane.b32.xlu0 %v1158, 96
        %v1566 = vpop.permute.xlu0 %1565
        %v1567 = vsel %vm856, %v1562, %v1564
        %v1568 = vsel %vm856, %v1564, %v1566
        %v1571 = vsel %vm1189, %v1567, 0.0
        %v1572 = vsel %vm1190, %v1568, 0.0
        %s1573 = scalar_lea.vmem %s3, 24
        %v1574 = vld [vmem:[%s1573] sm:$0xf]
        %v1576 = vsel %vm312, %v1574, 0
        %v1579 = vsel %vm316, %v1571, 0
        %v1582 = vsel %vm316, %v1572, 0
        %1584 = vmatpush.msra.mxu0 0.0
        %1585 = vmatpush.msra.mxu0 0.0
        %1586 = vmatpush.msra.mxu0 0.0
        %1587 = vmatpush.msra.mxu0 0.0
        %1588 = vmatpush.msra.mxu0 0.0
        %1589 = vmatpush.msra.mxu0 0.0
        %1590 = vmatpush.msra.mxu0 0.0
        %1591 = vmatpush.msra.mxu0 0.0
        %1592 = vmatpush.msra.mxu0 0.0
        %1593 = vmatpush.msra.mxu0 0.0
        %1594 = vmatpush.msra.mxu0 0.0
        %1595 = vmatpush.msra.mxu0 0.0
        %1596 = vmatpush.msra.mxu0 0.0
        %1597 = vmatpush.msra.mxu0 0.0
        %1598 = vmatpush.msra.mxu0 0.0
        %1599 = vmatpush.msra.mxu0 %v1579
        %1600 = vmatmul.f32.gmra.mxu0 %v1576
        %v1601 = vpop.f32.mrf.mxu0
        %v1602 = vadd.f32 0.0, %v1601
        %1603 = vdwg.mxu0
        %1604 = vmatpush.msra.mxu0 0.0
        %1605 = vmatpush.msra.mxu0 0.0
        %1606 = vmatpush.msra.mxu0 0.0
        %1607 = vmatpush.msra.mxu0 0.0
        %1608 = vmatpush.msra.mxu0 0.0
        %1609 = vmatpush.msra.mxu0 0.0
        %1610 = vmatpush.msra.mxu0 0.0
        %1611 = vmatpush.msra.mxu0 0.0
        %1612 = vmatpush.msra.mxu0 0.0
        %1613 = vmatpush.msra.mxu0 0.0
        %1614 = vmatpush.msra.mxu0 0.0
        %1615 = vmatpush.msra.mxu0 0.0
        %1616 = vmatpush.msra.mxu0 0.0
        %1617 = vmatpush.msra.mxu0 0.0
        %1618 = vmatpush.msra.mxu0 0.0
        %1619 = vmatpush.msra.mxu0 %v1582
        %1620 = vmatmul.f32.gmra.mxu0 %v1576
        %v1621 = vpop.f32.mrf.mxu0
        %v1622 = vadd.f32 0.0, %v1621
        %1623 = vdwg.mxu0
        %v1624 = vadd.f32 %v1559, %v1602
        %v1625 = vadd.f32 %v1560, %v1622
        %s1626 = scalar_lea.vmem %s3, 28
        %v1627 = vld [vmem:[%s1626] sm:$0xf]
        %1628 = vrot.lane.b32.xlu0 %v1156, 95
        %v1629 = vpop.permute.xlu0 %1628
        %1630 = vrot.lane.b32.xlu0 %v1157, 95
        %v1631 = vpop.permute.xlu0 %1630
        %1632 = vrot.lane.b32.xlu0 %v1158, 95
        %v1633 = vpop.permute.xlu0 %1632
        %v1634 = vsel %vm956, %v1629, %v1631
        %v1635 = vsel %vm956, %v1631, %v1633
        %v1637 = vsel %vm312, %v1627, 0
        %v1639 = vsel %vm316, %v1634, 0
        %v1641 = vsel %vm316, %v1635, 0
        %1643 = vmatpush.msra.mxu0 0.0
        %1644 = vmatpush.msra.mxu0 0.0
        %1645 = vmatpush.msra.mxu0 0.0
        %1646 = vmatpush.msra.mxu0 0.0
        %1647 = vmatpush.msra.mxu0 0.0
        %1648 = vmatpush.msra.mxu0 0.0
        %1649 = vmatpush.msra.mxu0 0.0
        %1650 = vmatpush.msra.mxu0 0.0
        %1651 = vmatpush.msra.mxu0 0.0
        %1652 = vmatpush.msra.mxu0 0.0
        %1653 = vmatpush.msra.mxu0 0.0
        %1654 = vmatpush.msra.mxu0 0.0
        %1655 = vmatpush.msra.mxu0 0.0
        %1656 = vmatpush.msra.mxu0 0.0
        %1657 = vmatpush.msra.mxu0 0.0
        %1658 = vmatpush.msra.mxu0 %v1639
        %1659 = vmatmul.f32.gmra.mxu0 %v1637
        %v1660 = vpop.f32.mrf.mxu0
        %v1661 = vadd.f32 0.0, %v1660
        %1662 = vdwg.mxu0
        %1663 = vmatpush.msra.mxu0 0.0
        %1664 = vmatpush.msra.mxu0 0.0
        %1665 = vmatpush.msra.mxu0 0.0
        %1666 = vmatpush.msra.mxu0 0.0
        %1667 = vmatpush.msra.mxu0 0.0
        %1668 = vmatpush.msra.mxu0 0.0
        %1669 = vmatpush.msra.mxu0 0.0
        %1670 = vmatpush.msra.mxu0 0.0
        %1671 = vmatpush.msra.mxu0 0.0
        %1672 = vmatpush.msra.mxu0 0.0
        %1673 = vmatpush.msra.mxu0 0.0
        %1674 = vmatpush.msra.mxu0 0.0
        %1675 = vmatpush.msra.mxu0 0.0
        %1676 = vmatpush.msra.mxu0 0.0
        %1677 = vmatpush.msra.mxu0 0.0
        %1678 = vmatpush.msra.mxu0 %v1641
        %1679 = vmatmul.f32.gmra.mxu0 %v1637
        %v1680 = vpop.f32.mrf.mxu0
        %v1681 = vadd.f32 0.0, %v1680
        %1682 = vdwg.mxu0
        %v1683 = vadd.f32 %v1624, %v1661
        %v1684 = vadd.f32 %v1625, %v1681
        %1685 = vrot.lane.b32.xlu0 %v1156, 94
        %v1686 = vpop.permute.xlu0 %1685
        %1687 = vrot.lane.b32.xlu0 %v1157, 94
        %v1688 = vpop.permute.xlu0 %1687
        %1689 = vrot.lane.b32.xlu0 %v1158, 94
        %v1690 = vpop.permute.xlu0 %1689
        %v1691 = vsel %vm1043, %v1686, %v1688
        %v1692 = vsel %vm1043, %v1688, %v1690
        %v1695 = vsel %vm1305, %v1691, 0.0
        %v1696 = vsel %vm1306, %v1692, 0.0
        %s1697 = scalar_lea.vmem %s3, 32
        %v1698 = vld [vmem:[%s1697] sm:$0xf]
        %v1700 = vsel %vm312, %v1698, 0
        %v1703 = vsel %vm316, %v1695, 0
        %v1706 = vsel %vm316, %v1696, 0
        %1708 = vmatpush.msra.mxu0 0.0
        %1709 = vmatpush.msra.mxu0 0.0
        %1710 = vmatpush.msra.mxu0 0.0
        %1711 = vmatpush.msra.mxu0 0.0
        %1712 = vmatpush.msra.mxu0 0.0
        %1713 = vmatpush.msra.mxu0 0.0
        %1714 = vmatpush.msra.mxu0 0.0
        %1715 = vmatpush.msra.mxu0 0.0
        %1716 = vmatpush.msra.mxu0 0.0
        %1717 = vmatpush.msra.mxu0 0.0
        %1718 = vmatpush.msra.mxu0 0.0
        %1719 = vmatpush.msra.mxu0 0.0
        %1720 = vmatpush.msra.mxu0 0.0
        %1721 = vmatpush.msra.mxu0 0.0
        %1722 = vmatpush.msra.mxu0 0.0
        %1723 = vmatpush.msra.mxu0 %v1703
        %1724 = vmatmul.f32.gmra.mxu0 %v1700
        %v1725 = vpop.f32.mrf.mxu0
        %v1726 = vadd.f32 0.0, %v1725
        %1727 = vdwg.mxu0
        %1728 = vmatpush.msra.mxu0 0.0
        %1729 = vmatpush.msra.mxu0 0.0
        %1730 = vmatpush.msra.mxu0 0.0
        %1731 = vmatpush.msra.mxu0 0.0
        %1732 = vmatpush.msra.mxu0 0.0
        %1733 = vmatpush.msra.mxu0 0.0
        %1734 = vmatpush.msra.mxu0 0.0
        %1735 = vmatpush.msra.mxu0 0.0
        %1736 = vmatpush.msra.mxu0 0.0
        %1737 = vmatpush.msra.mxu0 0.0
        %1738 = vmatpush.msra.mxu0 0.0
        %1739 = vmatpush.msra.mxu0 0.0
        %1740 = vmatpush.msra.mxu0 0.0
        %1741 = vmatpush.msra.mxu0 0.0
        %1742 = vmatpush.msra.mxu0 0.0
        %1743 = vmatpush.msra.mxu0 %v1706
        %1744 = vmatmul.f32.gmra.mxu0 %v1700
        %v1745 = vpop.f32.mrf.mxu0
        %v1746 = vadd.f32 0.0, %v1745
        %1747 = vdwg.mxu0
        %v1748 = vadd.f32 %v1683, %v1726
        %v1749 = vadd.f32 %v1684, %v1746
        %v1750 = vld [vmem:[%s4] sm:$0xf]
        %1752 = vset.pattern.permute.xlu0 0
        %1753 = vperm.xlu0 %1752, %v1750
        %v1754 = vpop.permute.xlu0 %1753
        %v1756 = vadd.f32 %v1748, %v1754
        %v1757 = vadd.f32 %v1749, %v1754
        %1758 = vst [vmem:[#allocation1] ss:$2 sm:$0xff] %v223
        %s1759 = scalar_lea.vmem [#allocation1], 16
        %1760 = vst [vmem:[%s1759] ss:$2 sm:$0xff] %v224
        %v1761 = vld.sshfl [vmem:[#allocation1] sm:$0xff pattern:$0x75316420]
        %v1762 = vld.sshfl [vmem:[#allocation1 + $0x8] sm:$0xff pattern:$0x75316420]
        %v1763 = vld.sshfl [vmem:[#allocation1 + $0x10] sm:$0xff pattern:$0x75316420]
        %1764 = vrot.lane.b32.xlu0 %v1761, 94
        %v1765 = vpop.permute.xlu0 %1764
        %1766 = vrot.lane.b32.xlu0 %v1762, 94
        %v1767 = vpop.permute.xlu0 %1766
        %1768 = vrot.lane.b32.xlu0 %v1763, 94
        %v1769 = vpop.permute.xlu0 %1768
        %v1770 = vsel %vm1043, %v1765, %v1767
        %v1771 = vsel %vm1043, %v1767, %v1769
        %v1774 = vadd.f32 %v1756, %v1770
        %v1775 = vadd.f32 %v1757, %v1771
        %v1778 = vrot.slane %v1775, 4
        %v1779 = vsel %vm316, %v1774, %v1778
        %1781 = vst [vmem:[%s217] sm:$0xff] %v1779
        %s1782 = sand.u32 %s137, 1
        %s1783 = scalar_lea.sflag [#allocation3], %s1782
        %s1784 = sand.u32 %s137, 1
        %s1785 = smul.addr %s1784, 8
        %s1786 = scalar_lea.vmem [#allocation2], %s1785
        // Predicated region
        $region41: #{tpu_custom_call.1} parent=39 // pred_check
          %p1787 = pneg %p147
        $region42: #{tpu_custom_call.1} parent=39 // pred_check_branch
          %1789 = sbr.rel (%p1787) target = $region44
        $region43: #{tpu_custom_call.1} parent=39 // pred_region
          %1791 = vsyncadd %s1783, 0
          %s1792 = smul.addr %s19, 2
          %s1793 = smul.addr %s1792, 4
          %s1794 = scalar_lea.hbm %s5, %s1793
          %s1796 = sshll.u32 %s1786, 4
          %s1797 = int_to_ptr.vmem [resolvable:$true] %s1796
          %s1798 = sshll.u32 %s1794, 4
          %s1799 = int_to_ptr.hbm [resolvable:$true] %s1798
          %1801 = dma.vmem_to_hbm [thread:$0]  %s1797, 128, %s1799, %s1783
        $region44: #{tpu_custom_call.1} parent=39 // pred_fallthru
          _
      $region40: #{tpu_custom_call.1} parent=5 // pred_fallthru
        _
      %p1802 = scmp.le.s32.totalorder 2, %s14
      // Predicated region
      $region45: #{tpu_custom_call.1} parent=5 // pred_check
        %p1803 = pneg %p1802
      $region46: #{tpu_custom_call.1} parent=5 // pred_check_branch
        %1805 = sbr.rel (%p1803) target = $region48
      $region47: #{tpu_custom_call.1} parent=5 // pred_region
        %s1806 = ssub.s32 %s14, 2
        // Predicated region
        $region49: #{tpu_custom_call.1} parent=47 // pred_check
          %p1807 = pneg %p153
        $region50: #{tpu_custom_call.1} parent=47 // pred_check_branch
          %1809 = sbr.rel (%p1807) target = $region52
        $region51: #{tpu_custom_call.1} parent=47 // pred_region
          %s1810 = sand.u32 %s138, 1
          %s1811 = scalar_lea.sflag [#allocation3], %s1810
          %s1812 = sand.u32 %s138, 1
          %s1813 = smul.addr %s1812, 8
          %s1814 = scalar_lea.vmem [#allocation2], %s1813
          %1816 = dma.done %s1811, 128
        $region52: #{tpu_custom_call.1} parent=47 // pred_fallthru
          _
      $region48: #{tpu_custom_call.1} parent=5 // pred_fallthru
        _
    $region6: #{tpu_custom_call.1} parent=1 // loop_footer
      %s18 = sadd.s32 1, %s14
    $region7: #{tpu_custom_call.1} parent=1 // loop_footer_branch
      %13 = sbr.rel target = $region3
    $region8: #{tpu_custom_call.1} parent=1 // loop_exit
      _
    %1817 = vsyncpa [#allocation3], 1
    %s1818 = scalar_lea.sflag [#allocation3], 1
    %1819 = vsyncpa %s1818, 1

</llo_original>
